<compile_context>
chip_gen: v5e
topology: v5e:2x2
jax: 0.10.0
libtpu: 0.0.40
codegen_flags: <defaults>
</compile_context>

<pallas_src>
import functools

import numpy as np
import jax
import jax.numpy as jnp
from jax.experimental import pallas as pl
from jax.experimental.pallas import tpu as pltpu

_VMEM = pl.BlockSpec(memory_space=pltpu.MemorySpace.VMEM)


def _mm(a, w_bf16):
    # Weight matmul: bf16 operands on the MXU, f32 accumulation.
    # (weights are pre-cast to bf16 at init; only the activation casts here)
    return jnp.dot(a.astype(jnp.bfloat16), w_bf16, preferred_element_type=jnp.float32)


def _mm_exact(a, b):
    # Exact f32 matmul (one-hot gather / scatter-add / scatter-mean matrices).
    return jnp.dot(a, b, preferred_element_type=jnp.float32)


# ---------------------------------------------------------------------------
# Kernel 1: the whole ShapeGNN stack, grid=(num_layers,)
#   tuple LayerNorm -> Ws/Wv -> fused gathers -> messages -> fused scatter
#   -> residuals -> GatedEquivLayer (Wu) -> residuals, state kept in VMEM.
# ---------------------------------------------------------------------------
def _gnn_kernel(s0_ref, pos0_ref, rbf_ref, r_ref, gsrc_ref, gdst_ref, sadd_ref,
                ln_g_ref, ln_b_ref, ws_w_ref, ws_b_ref, wv_bd_ref,
                msg_w_ref, msg_b_ref,
                wu_wv_ref, wu_ws0_ref, wu_b0_ref, wu_ws1_ref, wu_b1_ref,
                s_ref, v_ref, pos_ref, *, h):
    l = pl.program_id(0)

    # State initialization at the first layer; s/v/pos output blocks have a constant
    # index_map so they stay VMEM-resident and carry the state across grid steps.
    @pl.when(l == 0)
    def _init():
        s_ref[...] = s0_ref[...]
        v_ref[...] = jnp.zeros_like(v_ref)          # v0 = 0  (lane-packed [N, 3h])
        pos_ref[...] = pos0_ref[...]

    s_in = s_ref[...]                               # [N, h]
    v_in = v_ref[...]                               # [N, 3h]   (x | y | z blocks)
    pos = pos_ref[...]                              # [N, 3]

    # ------------------- tuple LayerNorm on (s, v) -------------------
    mean = jnp.mean(s_in, axis=-1, keepdims=True)
    var = jnp.mean(jnp.square(s_in - mean), axis=-1, keepdims=True)
    s_n = (s_in - mean) * jax.lax.rsqrt(var + 1e-5) * ln_g_ref[0] + ln_b_ref[0]

    vn2 = (jnp.square(v_in[:, 0:h]) + jnp.square(v_in[:, h:2 * h])
           + jnp.square(v_in[:, 2 * h:3 * h]))                       # [N, h]
    inv_vden = jax.lax.rsqrt(                                        # EUP rsqrt (opt 13)
        jnp.mean(jnp.maximum(vn2, 1e-8), axis=-1, keepdims=True))    # [N, 1]
    v_n = v_in * inv_vden                                            # [N, 3h]

    # ------------- Ws / Wv node projections + lane-packed node slab -------------
    us = _mm(s_n, ws_w_ref[0]) + ws_b_ref[0]                         # [N, h]
    uv = _mm(v_n, wv_bd_ref[0])                                      # [N, 3h] block-diag Wv
    node_pack = jnp.concatenate([s_n, us, uv, pos], axis=-1)         # [N, 5h+3]

    # -------- fused per-edge gathers: 2 exact one-hot matmuls (opt 1) --------
    src = _mm_exact(gsrc_ref[...], node_pack)                        # [E, 5h+3] (j = source)
    dst = _mm_exact(gdst_ref[...], node_pack)                        # [E, 5h+3] (i = target)
    xs_j = src[:, 0:h]
    us_j = src[:, h:2 * h]
    xv_j = src[:, 2 * h:5 * h]
    pos_j = src[:, 5 * h:5 * h + 3]
    xs_i = dst[:, 0:h]
    xv_i = dst[:, 2 * h:5 * h]
    pos_i = dst[:, 5 * h:5 * h + 3]
    dpos = pos_i - pos_j

    # ------------------- edge messages: ONE matmul (opt 4) -------------------
    msg_in = jnp.concatenate([xs_i, xs_j, rbf_ref[...]], axis=-1)    # [E, 2h+8]
    mij = _mm(msg_in, msg_w_ref[0]) + msg_b_ref[0]                   # [E, 3h+1]
    a = mij[:, 0:h]
    bg = mij[:, h:2 * h]
    cg = mij[:, 2 * h:3 * h]
    dg = mij[:, 3 * h:3 * h + 1]

    r = r_ref[...]                                                   # [E, 3]
    ix, iy, iz = xv_i[:, 0:h], xv_i[:, h:2 * h], xv_i[:, 2 * h:3 * h]
    jx, jy, jz = xv_j[:, 0:h], xv_j[:, h:2 * h], xv_j[:, 2 * h:3 * h]
    cx = iy * jz - iz * jy
    cy = iz * jx - ix * jz
    cz = ix * jy - iy * jx

    # lane-packed message slab [E, 4h+3] = [s_msg | v_msg(3h) | pos_msg]  (opt 2)
    slab = jnp.concatenate(
        [a * us_j,
         bg * cx + cg * r[:, 0:1],
         bg * cy + cg * r[:, 1:2],
         bg * cz + cg * r[:, 2:3],
         dg * dpos], axis=-1)

    # ---------- scatter-add aggregation (one matmul) + residuals ----------
    agg = _mm_exact(sadd_ref[...], slab)                             # [N, 4h+3]
    ms = agg[:, 0:h] + s_n
    mv = agg[:, h:4 * h] + v_n                                       # [N, 3h]
    pos_ref[...] = agg[:, 4 * h:4 * h + 3] + pos

    # ------------------- GatedEquivLayer (Wu) + residuals -------------------
    vw = _mm(mv, wu_wv_ref[0])                                       # [N, 6h] = [vw0 | vw1]
    vw0 = vw[:, 0:3 * h]
    vw1 = vw[:, 3 * h:6 * h]
    vnorm = jnp.sqrt(jnp.maximum(
        jnp.square(vw0[:, 0:h]) + jnp.square(vw0[:, h:2 * h])
        + jnp.square(vw0[:, 2 * h:3 * h]), 1e-6))                    # [N, h]
    h1 = _mm(jnp.concatenate([ms, vnorm], axis=-1), wu_ws0_ref[0]) + wu_b0_ref[0]
    h1 = h1 * jax.nn.sigmoid(h1)                                     # SiLU
    out = _mm(h1, wu_ws1_ref[0]) + wu_b1_ref[0]                      # [N, 2h] = [gate|scalar]
    sgate = out[:, 0:h]
    s_ref[...] = out[:, h:2 * h] + ms
    v_ref[...] = jnp.concatenate([sgate, sgate, sgate], axis=-1) * vw1 + mv


# ---------------------------------------------------------------------------
# Kernel 2: output head = final GatedEquivLayer + per-graph scatter-means
# ---------------------------------------------------------------------------
def _head_kernel(s_ref, v_ref, pos_ref, mmean_ref,
                 wv_ref, ws0_ref, b0_ref, ws1_ref, b1_ref,
                 shape_ref, point_ref, vflat_ref, transl_ref, *, h, emb, vo):
    v = v_ref[...]                                                   # [N, 3h]
    vw = _mm(v, wv_ref[...])                                         # [N, 3h + 3*vo]
    vw0 = vw[:, 0:3 * h]
    vw1 = vw[:, 3 * h:3 * h + 3 * vo]
    vnorm = jnp.sqrt(jnp.maximum(
        jnp.square(vw0[:, 0:h]) + jnp.square(vw0[:, h:2 * h])
        + jnp.square(vw0[:, 2 * h:3 * h]), 1e-6))
    h1 = _mm(jnp.concatenate([s_ref[...], vnorm], axis=-1), ws0_ref[...]) + b0_ref[...]
    h1 = h1 * jax.nn.sigmoid(h1)
    out = _mm(h1, ws1_ref[...]) + b1_ref[...]                        # [N, vo + 2*emb]
    sgate = out[:, 0:vo]
    sout = out[:, vo:]                                               # [N, 2*emb]

    point_ref[...] = sout[:, emb:2 * emb]                            # per-node embed

    mmean = mmean_ref[...]                                           # [B, N] mean scatter
    shape_ref[...] = _mm_exact(mmean, sout[:, 0:emb])                # [B, emb]
    gated = jnp.concatenate([sgate, sgate, sgate], axis=-1) * vw1    # [N, 3*vo]
    vflat_ref[...] = _mm_exact(mmean, gated)                         # [B, 3*vo]
    transl_ref[...] = _mm_exact(mmean, pos_ref[...])                 # [B, 3]


# ---------------------------------------------------------------------------
# Deterministic parameter initialization (PyTorch-Linear-style uniform),
# pre-cast to bf16 and pre-packed into kernel-ready (stacked / block-diag) form.
# ---------------------------------------------------------------------------
def _linear_init(key, fan_in, fan_out, bias=True):
    k1, k2 = jax.random.split(key)
    bound = 1.0 / float(np.sqrt(fan_in))
    w = jax.random.uniform(k1, (fan_in, fan_out), jnp.float32, -bound, bound)
    if bias:
        b = jax.random.uniform(k2, (fan_out,), jnp.float32, -bound, bound)
        return w, b
    return w, None


def _bdiag3(w):
    return jax.scipy.linalg.block_diag(w, w, w)


def _gated_init(key, si, vi, so, vo):
    h_dim = max(vi, vo)
    k0, k1, k2, k3 = jax.random.split(key, 4)
    wv0, _ = _linear_init(k0, vi, h_dim, bias=False)
    wv1, _ = _linear_init(k1, vi, vo, bias=False)
    ws0, b0 = _linear_init(k2, si + h_dim, h_dim)
    ws1, b1 = _linear_init(k3, h_dim, vo + so)
    # block-diag over the 3 spatial components, Wv0|Wv1 fused along output lanes:
    # (v packed [N,3vi]) @ wv -> [N, 3*h_dim + 3*vo] = [vw0 packed | vw1 packed]
    wv = jnp.concatenate([_bdiag3(wv0), _bdiag3(wv1)], axis=1)
    return dict(wv=wv.astype(jnp.bfloat16),
                ws0=ws0.astype(jnp.bfloat16), b0=b0.reshape(1, -1),
                ws1=ws1.astype(jnp.bfloat16), b1=b1.reshape(1, -1))


def init_encoder_params(key, hidden, emb, num_layers):
    h = hidden
    keys = jax.random.split(key, 2 + num_layers)
    ohe_w, ohe_b = _linear_init(keys[0], 4, h)

    ln_g, ln_b, ws_w, ws_b, wv_bd = [], [], [], [], []
    msg_w, msg_b = [], []
    wu_wv, wu_ws0, wu_b0, wu_ws1, wu_b1 = [], [], [], [], []
    for i in range(num_layers):
        lk = jax.random.split(keys[1 + i], 4)
        mw, mb = _linear_init(lk[0], 2 * h + 8, 3 * h + 1)
        sw, sb = _linear_init(lk[1], h, h)
        vw, _ = _linear_init(lk[2], h, h, bias=False)
        wu = _gated_init(lk[3], h, h, h, h)
        ln_g.append(jnp.ones((1, h), jnp.float32))
        ln_b.append(jnp.zeros((1, h), jnp.float32))
        ws_w.append(sw.astype(jnp.bfloat16))
        ws_b.append(sb.reshape(1, h))
        wv_bd.append(_bdiag3(vw).astype(jnp.bfloat16))
        msg_w.append(mw.astype(jnp.bfloat16))          # full (unsplit) message weight
        msg_b.append(mb.reshape(1, -1))
        wu_wv.append(wu['wv'])
        wu_ws0.append(wu['ws0'])
        wu_b0.append(wu['b0'])
        wu_ws1.append(wu['ws1'])
        wu_b1.append(wu['b1'])

    lin = _gated_init(keys[1 + num_layers], h, h, 2 * emb, 2)
    return dict(
        ohe_w=ohe_w, ohe_b=ohe_b,
        ln_g=jnp.stack(ln_g), ln_b=jnp.stack(ln_b),
        ws_w=jnp.stack(ws_w), ws_b=jnp.stack(ws_b),
        wv_bd=jnp.stack(wv_bd),
        msg_w=jnp.stack(msg_w), msg_b=jnp.stack(msg_b),
        wu_wv=jnp.stack(wu_wv), wu_ws0=jnp.stack(wu_ws0), wu_b0=jnp.stack(wu_b0),
        wu_ws1=jnp.stack(wu_ws1), wu_b1=jnp.stack(wu_b1),
        lin_wv=lin['wv'], lin_ws0=lin['ws0'], lin_b0=lin['b0'],
        lin_ws1=lin['ws1'], lin_b1=lin['b1'])


# ---------------------------------------------------------------------------
# Rotation from two vectors (Gram-Schmidt) -- tiny [B,3] math, plain JAX.
# ---------------------------------------------------------------------------
def get_rotation_matrix_from_two_vector(v1, v2):
    # TODO(synk): reference `get_rotation_matrix_from_two_vector` not provided;
    # implemented as standard Gram-Schmidt (6D rotation representation).
    def _norm(x):
        return x / jnp.sqrt(jnp.maximum(jnp.sum(x * x, -1, keepdims=True), 1e-8))
    e1 = _norm(v1)
    u2 = v2 - jnp.sum(e1 * v2, -1, keepdims=True) * e1
    e2 = _norm(u2)
    e3 = jnp.cross(e1, e2)
    return jnp.stack([e1, e2, e3], axis=-1)


# ---------------------------------------------------------------------------
# Full Encoder forward
# ---------------------------------------------------------------------------
@functools.partial(jax.jit, static_argnames=("hidden", "emb"))
def encoder_forward(params, pos, batch, batch_num_nodes, edge_src, edge_dst,
                    *, hidden, emb):
    N = pos.shape[0]
    B = batch_num_nodes.shape[0]
    E = edge_src.shape[0]
    h = hidden
    L = params['ln_g'].shape[0]

    # one-hot node scalars through ohe_lin: s0 = tile(eye(4)) @ W + b reduces exactly
    # to tiling the weight rows (matches the reference's fixed eye(4)-per-graph init).
    s0 = jnp.tile(params['ohe_w'], (B, 1)) + params['ohe_b'][None, :]     # [N, h]

    # static edge geometry + Gaussian RBF (edge_attr is fixed across layers in the
    # reference: computed once from the initial positions).
    r = pos[edge_src] - pos[edge_dst]                                     # [E, 3]
    d = jnp.maximum(jnp.sum(r * r, axis=-1, keepdims=True), 1e-4)         # squared dist
    mu = jnp.linspace(0.0, 4.0, 8).astype(jnp.float32).reshape(1, 8)
    gamma = 0.5 / (4.0 / 7.0) ** 2
    rbf = jnp.exp(-gamma * jnp.square(d - mu))                            # [E, 8]

    # dense one-hot gather / scatter matrices (DMA'd ONCE for the whole fused stack)
    ar_n = jnp.arange(N)
    g_src = (edge_src[:, None] == ar_n[None, :]).astype(jnp.float32)      # [E, N]
    g_dst = (edge_dst[:, None] == ar_n[None, :]).astype(jnp.float32)      # [E, N]
    s_add = g_dst.T                                                       # [N, E]
    m_mean = (batch[None, :] == jnp.arange(B)[:, None]).astype(jnp.float32)
    m_mean = m_mean / jnp.sum(m_mean, axis=1, keepdims=True)              # [B, N]

    # ---- ONE fused pallas_call for all GNN layers: grid=(L,), state in VMEM ----
    def _inv_spec(shape):
        return pl.BlockSpec(shape, lambda l, _nd=len(shape): (0,) * _nd)

    def _layer_spec(arr):
        blk = (1,) + arr.shape[1:]
        return pl.BlockSpec(blk, lambda l, _nd=arr.ndim - 1: (l,) + (0,) * _nd)

    weight_names = ('ln_g', 'ln_b', 'ws_w', 'ws_b', 'wv_bd', 'msg_w', 'msg_b',
                    'wu_wv', 'wu_ws0', 'wu_b0', 'wu_ws1', 'wu_b1')

    in_specs = ([_inv_spec((N, h)), _inv_spec((N, 3)), _inv_spec((E, 8)),
                 _inv_spec((E, 3)), _inv_spec((E, N)), _inv_spec((E, N)),
                 _inv_spec((N, E))]
                + [_layer_spec(params[name]) for name in weight_names])
    out_specs = (_inv_spec((N, h)), _inv_spec((N, 3 * h)), _inv_spec((N, 3)))
    out_shape = (jax.ShapeDtypeStruct((N, h), jnp.float32),
                 jax.ShapeDtypeStruct((N, 3 * h), jnp.float32),
                 jax.ShapeDtypeStruct((N, 3), jnp.float32))

    gnn_call = pl.pallas_call(
        functools.partial(_gnn_kernel, h=h),
        grid=(L,),
        in_specs=in_specs,
        out_specs=out_specs,
        out_shape=out_shape,
        compiler_params=pltpu.CompilerParams(
            dimension_semantics=("arbitrary",),          # state carried across layers
            vmem_limit_bytes=32 * 1024 * 1024),
    )
    s_out, v_out, pos_out = gnn_call(
        s0, pos, rbf, r, g_src, g_dst, s_add,
        *[params[name] for name in weight_names])

    # ---- output head: final GatedEquivLayer + per-graph means (one call) ----
    head_call = pl.pallas_call(
        functools.partial(_head_kernel, h=h, emb=emb, vo=2),
        out_shape=(jax.ShapeDtypeStruct((B, emb), jnp.float32),
                   jax.ShapeDtypeStruct((N, emb), jnp.float32),
                   jax.ShapeDtypeStruct((B, 6), jnp.float32),
                   jax.ShapeDtypeStruct((B, 3), jnp.float32)),
        in_specs=[_VMEM] * 9,
        out_specs=(_VMEM,) * 4,
    )
    shape_embed, point_embed, vflat, transl_out = head_call(
        s_out, v_out, pos_out, m_mean,
        params['lin_wv'], params['lin_ws0'], params['lin_b0'],
        params['lin_ws1'], params['lin_b1'])

    # vflat columns are [x0 x1 | y0 y1 | z0 z1] -> [B, 2, 3] like the reference
    vout = jnp.transpose(vflat.reshape(B, 3, 2), (0, 2, 1))
    rot = get_rotation_matrix_from_two_vector(vout[:, 0], vout[:, 1])
    return shape_embed, point_embed, rot, transl_out, vout


# ---------------------------------------------------------------------------
if __name__ == "__main__":
    key = jax.random.PRNGKey(0)
    hidden, emb, num_layers = 32, 8, 2

    batch_num_nodes_np = np.array([4, 4], dtype=np.int32)  # eye(4) => 4 nodes / graph
    B = len(batch_num_nodes_np)
    N = int(batch_num_nodes_np.sum())

    kp, kw = jax.random.split(key)
    pos = jax.random.normal(kp, (N, 3), jnp.float32)
    batch = jnp.asarray(np.repeat(np.arange(B), batch_num_nodes_np).astype(np.int32))

    # fully-connected (no self-loops) block-diagonal edges, nonzero() row-major order
    # TODO(synk): knn_graph path (use_fc=False) not implemented.
    rows, cols = [], []
    off = 0
    for n in batch_num_nodes_np.tolist():
        for rr in range(n):
            for cc in range(n):
                if rr != cc:
                    rows.append(off + rr)
                    cols.append(off + cc)
        off += n
    edge_src = jnp.asarray(np.array(rows, dtype=np.int32))   # j (source)
    edge_dst = jnp.asarray(np.array(cols, dtype=np.int32))   # i (target / aggregation)

    params = init_encoder_params(kw, hidden, emb, num_layers)

    out = encoder_forward(params, pos, batch, jnp.asarray(batch_num_nodes_np),
                          edge_src, edge_dst, hidden=hidden, emb=emb)
    out = jax.block_until_ready(out)
    shape_embed, point_embed, rot, transl_out, vout = out

    assert shape_embed.shape == (B, emb)
    assert point_embed.shape == (N, emb)
    assert rot.shape == (B, 3, 3)
    assert transl_out.shape == (B, 3)
    assert vout.shape == (B, 2, 3)
    assert all(bool(jnp.all(jnp.isfinite(o))) for o in out)
    print("KERNEL_OK")
</pallas_src>

<mosaic_0001>
module attributes {stable_mosaic.version = 11 : i64} {
  func.func @_head_kernel(%arg0: memref<8x32xf32, #tpu.memory_space<vmem>>, %arg1: memref<8x96xf32, #tpu.memory_space<vmem>>, %arg2: memref<8x3xf32, #tpu.memory_space<vmem>>, %arg3: memref<2x8xf32, #tpu.memory_space<vmem>>, %arg4: memref<96x102xbf16, #tpu.memory_space<vmem>>, %arg5: memref<64x32xbf16, #tpu.memory_space<vmem>>, %arg6: memref<1x32xf32, #tpu.memory_space<vmem>>, %arg7: memref<32x18xbf16, #tpu.memory_space<vmem>>, %arg8: memref<1x18xf32, #tpu.memory_space<vmem>>, %arg9: memref<2x8xf32, #tpu.memory_space<vmem>>, %arg10: memref<8x8xf32, #tpu.memory_space<vmem>>, %arg11: memref<2x6xf32, #tpu.memory_space<vmem>>, %arg12: memref<2x3xf32, #tpu.memory_space<vmem>>) attributes {dimension_semantics = [], scalar_prefetch = 0 : i64, scratch_operands = 0 : i64, tpu.core_type = #tpu.core_type<tc>} {
    %c0 = arith.constant 0 : index
    %c0_0 = arith.constant 0 : index
    %0 = vector.load %arg1[%c0, %c0_0] : memref<8x96xf32, #tpu.memory_space<vmem>>, vector<8x96xf32>
    %c0_1 = arith.constant 0 : index
    %c0_2 = arith.constant 0 : index
    %1 = vector.load %arg4[%c0_1, %c0_2] : memref<96x102xbf16, #tpu.memory_space<vmem>>, vector<96x102xbf16>
    %2 = arith.truncf %0 : vector<8x96xf32> to vector<8x96xbf16>
    %cst = arith.constant dense<0.000000e+00> : vector<8x102xf32>
    %3 = tpu.matmul %2, %1, %cst {dimension_numbers = #tpu.dot_dimension_numbers<[1], [0], [0], [1], [0, 0, 1, 1], [], []>} : vector<8x96xbf16>, vector<96x102xbf16>, vector<8x102xf32> -> vector<8x102xf32>
    %4 = vector.extract_strided_slice %3 {offsets = [0, 0], sizes = [8, 96], strides = [1, 1]} : vector<8x102xf32> to vector<8x96xf32>
    %5 = vector.extract_strided_slice %3 {offsets = [0, 96], sizes = [8, 6], strides = [1, 1]} : vector<8x102xf32> to vector<8x6xf32>
    %6 = vector.extract_strided_slice %4 {offsets = [0, 0], sizes = [8, 32], strides = [1, 1]} : vector<8x96xf32> to vector<8x32xf32>
    %7 = arith.mulf %6, %6 : vector<8x32xf32>
    %8 = vector.extract_strided_slice %4 {offsets = [0, 32], sizes = [8, 32], strides = [1, 1]} : vector<8x96xf32> to vector<8x32xf32>
    %9 = arith.mulf %8, %8 : vector<8x32xf32>
    %10 = arith.addf %7, %9 : vector<8x32xf32>
    %11 = vector.extract_strided_slice %4 {offsets = [0, 64], sizes = [8, 32], strides = [1, 1]} : vector<8x96xf32> to vector<8x32xf32>
    %12 = arith.mulf %11, %11 : vector<8x32xf32>
    %13 = arith.addf %10, %12 : vector<8x32xf32>
    %cst_3 = arith.constant 9.99999997E-7 : f32
    %14 = vector.broadcast %cst_3 : f32 to vector<8x32xf32>
    %15 = arith.maximumf %13, %14 : vector<8x32xf32>
    %16 = math.sqrt %15 : vector<8x32xf32>
    %c0_4 = arith.constant 0 : index
    %c0_5 = arith.constant 0 : index
    %17 = vector.load %arg0[%c0_4, %c0_5] : memref<8x32xf32, #tpu.memory_space<vmem>>, vector<8x32xf32>
    %18 = tpu.concatenate %17, %16 in 1 : vector<8x32xf32>, vector<8x32xf32> -> vector<8x64xf32>
    %c0_6 = arith.constant 0 : index
    %c0_7 = arith.constant 0 : index
    %19 = vector.load %arg5[%c0_6, %c0_7] : memref<64x32xbf16, #tpu.memory_space<vmem>>, vector<64x32xbf16>
    %20 = arith.truncf %18 : vector<8x64xf32> to vector<8x64xbf16>
    %cst_8 = arith.constant dense<0.000000e+00> : vector<8x32xf32>
    %21 = tpu.matmul %20, %19, %cst_8 {dimension_numbers = #tpu.dot_dimension_numbers<[1], [0], [0], [1], [0, 0, 1, 1], [], []>} : vector<8x64xbf16>, vector<64x32xbf16>, vector<8x32xf32> -> vector<8x32xf32>
    %c0_9 = arith.constant 0 : index
    %c0_10 = arith.constant 0 : index
    %22 = vector.load %arg6[%c0_9, %c0_10] : memref<1x32xf32, #tpu.memory_space<vmem>>, vector<1x32xf32>
    %23 = vector.broadcast %22 : vector<1x32xf32> to vector<8x32xf32>
    %24 = arith.addf %21, %23 : vector<8x32xf32>
    %25 = arith.negf %24 : vector<8x32xf32>
    %26 = math.exp %25 : vector<8x32xf32>
    %cst_11 = arith.constant 1.000000e+00 : f32
    %27 = vector.broadcast %cst_11 : f32 to vector<8x32xf32>
    %28 = arith.addf %27, %26 : vector<8x32xf32>
    %29 = arith.divf %27, %28 : vector<8x32xf32>
    %30 = arith.mulf %24, %29 : vector<8x32xf32>
    %c0_12 = arith.constant 0 : index
    %c0_13 = arith.constant 0 : index
    %31 = vector.load %arg7[%c0_12, %c0_13] : memref<32x18xbf16, #tpu.memory_space<vmem>>, vector<32x18xbf16>
    %32 = arith.truncf %30 : vector<8x32xf32> to vector<8x32xbf16>
    %cst_14 = arith.constant dense<0.000000e+00> : vector<8x18xf32>
    %33 = tpu.matmul %32, %31, %cst_14 {dimension_numbers = #tpu.dot_dimension_numbers<[1], [0], [0], [1], [0, 0, 1, 1], [], []>} : vector<8x32xbf16>, vector<32x18xbf16>, vector<8x18xf32> -> vector<8x18xf32>
    %c0_15 = arith.constant 0 : index
    %c0_16 = arith.constant 0 : index
    %34 = vector.load %arg8[%c0_15, %c0_16] : memref<1x18xf32, #tpu.memory_space<vmem>>, vector<1x18xf32>
    %35 = vector.broadcast %34 : vector<1x18xf32> to vector<8x18xf32>
    %36 = arith.addf %33, %35 : vector<8x18xf32>
    %37 = vector.extract_strided_slice %36 {offsets = [0, 0], sizes = [8, 2], strides = [1, 1]} : vector<8x18xf32> to vector<8x2xf32>
    %38 = vector.extract_strided_slice %36 {offsets = [0, 2], sizes = [8, 16], strides = [1, 1]} : vector<8x18xf32> to vector<8x16xf32>
    %39 = vector.extract_strided_slice %38 {offsets = [0, 8], sizes = [8, 8], strides = [1, 1]} : vector<8x16xf32> to vector<8x8xf32>
    %c0_17 = arith.constant 0 : index
    %c0_18 = arith.constant 0 : index
    %40 = vector.load %arg10[%c0_17, %c0_18] : memref<8x8xf32, #tpu.memory_space<vmem>>, vector<8x8xf32>
    tpu.vector_store %arg10[%c0_17, %c0_18], %39 {strides = array<i32>} : memref<8x8xf32, #tpu.memory_space<vmem>>, vector<8x8xf32>,
    %c0_19 = arith.constant 0 : index
    %c0_20 = arith.constant 0 : index
    %41 = vector.load %arg3[%c0_19, %c0_20] : memref<2x8xf32, #tpu.memory_space<vmem>>, vector<2x8xf32>
    %42 = vector.extract_strided_slice %38 {offsets = [0, 0], sizes = [8, 8], strides = [1, 1]} : vector<8x16xf32> to vector<8x8xf32>
    %cst_21 = arith.constant dense<0.000000e+00> : vector<2x8xf32>
    %43 = tpu.matmul %41, %42, %cst_21 {dimension_numbers = #tpu.dot_dimension_numbers<[1], [0], [0], [1], [0, 0, 1, 1], [], []>} : vector<2x8xf32>, vector<8x8xf32>, vector<2x8xf32> -> vector<2x8xf32>
    %c0_22 = arith.constant 0 : index
    %c0_23 = arith.constant 0 : index
    %44 = vector.load %arg9[%c0_22, %c0_23] : memref<2x8xf32, #tpu.memory_space<vmem>>, vector<2x8xf32>
    tpu.vector_store %arg9[%c0_22, %c0_23], %43 {strides = array<i32>} : memref<2x8xf32, #tpu.memory_space<vmem>>, vector<2x8xf32>,
    %45 = tpu.concatenate %37, %37, %37 in 1 : vector<8x2xf32>, vector<8x2xf32>, vector<8x2xf32> -> vector<8x6xf32>
    %46 = arith.mulf %45, %5 : vector<8x6xf32>
    %cst_24 = arith.constant dense<0.000000e+00> : vector<2x6xf32>
    %47 = tpu.matmul %41, %46, %cst_24 {dimension_numbers = #tpu.dot_dimension_numbers<[1], [0], [0], [1], [0, 0, 1, 1], [], []>} : vector<2x8xf32>, vector<8x6xf32>, vector<2x6xf32> -> vector<2x6xf32>
    %c0_25 = arith.constant 0 : index
    %c0_26 = arith.constant 0 : index
    %48 = vector.load %arg11[%c0_25, %c0_26] : memref<2x6xf32, #tpu.memory_space<vmem>>, vector<2x6xf32>
    tpu.vector_store %arg11[%c0_25, %c0_26], %47 {strides = array<i32>} : memref<2x6xf32, #tpu.memory_space<vmem>>, vector<2x6xf32>,
    %c0_27 = arith.constant 0 : index
    %c0_28 = arith.constant 0 : index
    %49 = vector.load %arg2[%c0_27, %c0_28] : memref<8x3xf32, #tpu.memory_space<vmem>>, vector<8x3xf32>
    %cst_29 = arith.constant dense<0.000000e+00> : vector<2x3xf32>
    %50 = tpu.matmul %41, %49, %cst_29 {dimension_numbers = #tpu.dot_dimension_numbers<[1], [0], [0], [1], [0, 0, 1, 1], [], []>} : vector<2x8xf32>, vector<8x3xf32>, vector<2x3xf32> -> vector<2x3xf32>
    %c0_30 = arith.constant 0 : index
    %c0_31 = arith.constant 0 : index
    %51 = vector.load %arg12[%c0_30, %c0_31] : memref<2x3xf32, #tpu.memory_space<vmem>>, vector<2x3xf32>
    tpu.vector_store %arg12[%c0_30, %c0_31], %50 {strides = array<i32>} : memref<2x3xf32, #tpu.memory_space<vmem>>, vector<2x3xf32>,
    return
  }
}

module attributes {stable_mosaic.version = 11 : i64} {
  func.func @_gnn_kernel(%arg0: i32, %arg1: memref<8x32xf32, #tpu.memory_space<vmem>>, %arg2: memref<8x3xf32, #tpu.memory_space<vmem>>, %arg3: memref<24x8xf32, #tpu.memory_space<vmem>>, %arg4: memref<24x3xf32, #tpu.memory_space<vmem>>, %arg5: memref<24x8xf32, #tpu.memory_space<vmem>>, %arg6: memref<24x8xf32, #tpu.memory_space<vmem>>, %arg7: memref<8x24xf32, #tpu.memory_space<vmem>>, %arg8: memref<1x1x32xf32, #tpu.memory_space<vmem>>, %arg9: memref<1x1x32xf32, #tpu.memory_space<vmem>>, %arg10: memref<1x32x32xbf16, #tpu.memory_space<vmem>>, %arg11: memref<1x1x32xf32, #tpu.memory_space<vmem>>, %arg12: memref<1x96x96xbf16, #tpu.memory_space<vmem>>, %arg13: memref<1x72x97xbf16, #tpu.memory_space<vmem>>, %arg14: memref<1x1x97xf32, #tpu.memory_space<vmem>>, %arg15: memref<1x96x192xbf16, #tpu.memory_space<vmem>>, %arg16: memref<1x64x32xbf16, #tpu.memory_space<vmem>>, %arg17: memref<1x1x32xf32, #tpu.memory_space<vmem>>, %arg18: memref<1x32x64xbf16, #tpu.memory_space<vmem>>, %arg19: memref<1x1x64xf32, #tpu.memory_space<vmem>>, %arg20: memref<8x32xf32, #tpu.memory_space<vmem>>, %arg21: memref<8x96xf32, #tpu.memory_space<vmem>>, %arg22: memref<8x3xf32, #tpu.memory_space<vmem>>) attributes {dimension_semantics = [#tpu.dimension_semantics<arbitrary>], iteration_bounds = array<i64: 2>, scalar_prefetch = 0 : i64, scratch_operands = 0 : i64, tpu.core_type = #tpu.core_type<tc>, window_params = [{pipeline_mode = #tpu.pipeline_mode<synchronous>, transform_indices = @transform_0, window_bounds = array<i64: 8, 32>}, {pipeline_mode = #tpu.pipeline_mode<synchronous>, transform_indices = @transform_1, window_bounds = array<i64: 8, 3>}, {pipeline_mode = #tpu.pipeline_mode<synchronous>, transform_indices = @transform_2, window_bounds = array<i64: 24, 8>}, {pipeline_mode = #tpu.pipeline_mode<synchronous>, transform_indices = @transform_3, window_bounds = array<i64: 24, 3>}, {pipeline_mode = #tpu.pipeline_mode<synchronous>, transform_indices = @transform_4, window_bounds = array<i64: 24, 8>}, {pipeline_mode = #tpu.pipeline_mode<synchronous>, transform_indices = @transform_5, window_bounds = array<i64: 24, 8>}, {pipeline_mode = #tpu.pipeline_mode<synchronous>, transform_indices = @transform_6, window_bounds = array<i64: 8, 24>}, {transform_indices = @transform_7, window_bounds = array<i64: 1, 1, 32>}, {transform_indices = @transform_8, window_bounds = array<i64: 1, 1, 32>}, {transform_indices = @transform_9, window_bounds = array<i64: 1, 32, 32>}, {transform_indices = @transform_10, window_bounds = array<i64: 1, 1, 32>}, {transform_indices = @transform_11, window_bounds = array<i64: 1, 96, 96>}, {transform_indices = @transform_12, window_bounds = array<i64: 1, 72, 97>}, {transform_indices = @transform_13, window_bounds = array<i64: 1, 1, 97>}, {transform_indices = @transform_14, window_bounds = array<i64: 1, 96, 192>}, {transform_indices = @transform_15, window_bounds = array<i64: 1, 64, 32>}, {transform_indices = @transform_16, window_bounds = array<i64: 1, 1, 32>}, {transform_indices = @transform_17, window_bounds = array<i64: 1, 32, 64>}, {transform_indices = @transform_18, window_bounds = array<i64: 1, 1, 64>}, {pipeline_mode = #tpu.pipeline_mode<synchronous>, transform_indices = @transform_19, window_bounds = array<i64: 8, 32>}, {pipeline_mode = #tpu.pipeline_mode<synchronous>, transform_indices = @transform_20, window_bounds = array<i64: 8, 96>}, {pipeline_mode = #tpu.pipeline_mode<synchronous>, transform_indices = @transform_21, window_bounds = array<i64: 8, 3>}]} {
    %c0_i32 = arith.constant 0 : i32
    %0 = arith.cmpi eq, %arg0, %c0_i32 : i32
    %1 = arith.extui %0 : i1 to i32
    %c0_i32_0 = arith.constant 0 : i32
    %2 = arith.cmpi ne, %1, %c0_i32_0 : i32
    scf.if %2 {
      %c0_76 = arith.constant 0 : index
      %c0_77 = arith.constant 0 : index
      %180 = vector.load %arg1[%c0_76, %c0_77] : memref<8x32xf32, #tpu.memory_space<vmem>>, vector<8x32xf32>
      %c0_78 = arith.constant 0 : index
      %c0_79 = arith.constant 0 : index
      %181 = vector.load %arg20[%c0_78, %c0_79] : memref<8x32xf32, #tpu.memory_space<vmem>>, vector<8x32xf32>
      tpu.vector_store %arg20[%c0_78, %c0_79], %180 {strides = array<i32>} : memref<8x32xf32, #tpu.memory_space<vmem>>, vector<8x32xf32>,
      %cst_80 = arith.constant 0.000000e+00 : f32
      %182 = vector.broadcast %cst_80 : f32 to vector<8x96xf32>
      %c0_81 = arith.constant 0 : index
      %c0_82 = arith.constant 0 : index
      %183 = vector.load %arg21[%c0_81, %c0_82] : memref<8x96xf32, #tpu.memory_space<vmem>>, vector<8x96xf32>
      tpu.vector_store %arg21[%c0_81, %c0_82], %182 {strides = array<i32>} : memref<8x96xf32, #tpu.memory_space<vmem>>, vector<8x96xf32>,
      %c0_83 = arith.constant 0 : index
      %c0_84 = arith.constant 0 : index
      %184 = vector.load %arg2[%c0_83, %c0_84] : memref<8x3xf32, #tpu.memory_space<vmem>>, vector<8x3xf32>
      %c0_85 = arith.constant 0 : index
      %c0_86 = arith.constant 0 : index
      %185 = vector.load %arg22[%c0_85, %c0_86] : memref<8x3xf32, #tpu.memory_space<vmem>>, vector<8x3xf32>
      tpu.vector_store %arg22[%c0_85, %c0_86], %184 {strides = array<i32>} : memref<8x3xf32, #tpu.memory_space<vmem>>, vector<8x3xf32>,
    } else {
    }
    %c0 = arith.constant 0 : index
    %c0_1 = arith.constant 0 : index
    %3 = vector.load %arg20[%c0, %c0_1] : memref<8x32xf32, #tpu.memory_space<vmem>>, vector<8x32xf32>
    %c0_2 = arith.constant 0 : index
    %c0_3 = arith.constant 0 : index
    %4 = vector.load %arg21[%c0_2, %c0_3] : memref<8x96xf32, #tpu.memory_space<vmem>>, vector<8x96xf32>
    %c0_4 = arith.constant 0 : index
    %c0_5 = arith.constant 0 : index
    %5 = vector.load %arg22[%c0_4, %c0_5] : memref<8x3xf32, #tpu.memory_space<vmem>>, vector<8x3xf32>
    %cst = arith.constant dense<0.000000e+00> : vector<8xf32>
    %6 = vector.multi_reduction <add>, %3, %cst [1] : vector<8x32xf32> to vector<8xf32>
    %7 = vector.shape_cast %6 : vector<8xf32> to vector<8x1xf32>
    %cst_6 = arith.constant 3.200000e+01 : f32
    %8 = vector.broadcast %cst_6 : f32 to vector<8x1xf32>
    %9 = arith.divf %7, %8 : vector<8x1xf32>
    %10 = vector.broadcast %9 : vector<8x1xf32> to vector<8x32xf32>
    %11 = arith.subf %3, %10 : vector<8x32xf32>
    %12 = arith.mulf %11, %11 : vector<8x32xf32>
    %cst_7 = arith.constant dense<0.000000e+00> : vector<8xf32>
    %13 = vector.multi_reduction <add>, %12, %cst_7 [1] : vector<8x32xf32> to vector<8xf32>
    %14 = vector.shape_cast %13 : vector<8xf32> to vector<8x1xf32>
    %cst_8 = arith.constant 3.200000e+01 : f32
    %15 = vector.broadcast %cst_8 : f32 to vector<8x1xf32>
    %16 = arith.divf %14, %15 : vector<8x1xf32>
    %17 = vector.broadcast %9 : vector<8x1xf32> to vector<8x32xf32>
    %18 = arith.subf %3, %17 : vector<8x32xf32>
    %cst_9 = arith.constant 9.99999974E-6 : f32
    %19 = vector.broadcast %cst_9 : f32 to vector<8x1xf32>
    %20 = arith.addf %16, %19 : vector<8x1xf32>
    %21 = math.rsqrt %20 : vector<8x1xf32>
    %22 = vector.broadcast %21 : vector<8x1xf32> to vector<8x32xf32>
    %23 = arith.mulf %18, %22 : vector<8x32xf32>
    %c0_10 = arith.constant 0 : index
    %c0_11 = arith.constant 0 : index
    %c0_12 = arith.constant 0 : index
    %24 = vector.load %arg8[%c0_10, %c0_11, %c0_12] : memref<1x1x32xf32, #tpu.memory_space<vmem>>, vector<1x1x32xf32>
    %25 = vector.shape_cast %24 : vector<1x1x32xf32> to vector<1x32xf32>
    %26 = vector.broadcast %25 : vector<1x32xf32> to vector<8x32xf32>
    %27 = arith.mulf %23, %26 : vector<8x32xf32>
    %c0_13 = arith.constant 0 : index
    %c0_14 = arith.constant 0 : index
    %c0_15 = arith.constant 0 : index
    %28 = vector.load %arg9[%c0_13, %c0_14, %c0_15] : memref<1x1x32xf32, #tpu.memory_space<vmem>>, vector<1x1x32xf32>
    %29 = vector.shape_cast %28 : vector<1x1x32xf32> to vector<1x32xf32>
    %30 = vector.broadcast %29 : vector<1x32xf32> to vector<8x32xf32>
    %31 = arith.addf %27, %30 : vector<8x32xf32>
    %32 = vector.extract_strided_slice %4 {offsets = [0, 0], sizes = [8, 32], strides = [1, 1]} : vector<8x96xf32> to vector<8x32xf32>
    %33 = arith.mulf %32, %32 : vector<8x32xf32>
    %34 = vector.extract_strided_slice %4 {offsets = [0, 32], sizes = [8, 32], strides = [1, 1]} : vector<8x96xf32> to vector<8x32xf32>
    %35 = arith.mulf %34, %34 : vector<8x32xf32>
    %36 = arith.addf %33, %35 : vector<8x32xf32>
    %37 = vector.extract_strided_slice %4 {offsets = [0, 64], sizes = [8, 32], strides = [1, 1]} : vector<8x96xf32> to vector<8x32xf32>
    %38 = arith.mulf %37, %37 : vector<8x32xf32>
    %39 = arith.addf %36, %38 : vector<8x32xf32>
    %cst_16 = arith.constant 9.99999993E-9 : f32
    %40 = vector.broadcast %cst_16 : f32 to vector<8x32xf32>
    %41 = arith.maximumf %39, %40 : vector<8x32xf32>
    %cst_17 = arith.constant dense<0.000000e+00> : vector<8xf32>
    %42 = vector.multi_reduction <add>, %41, %cst_17 [1] : vector<8x32xf32> to vector<8xf32>
    %43 = vector.shape_cast %42 : vector<8xf32> to vector<8x1xf32>
    %cst_18 = arith.constant 3.200000e+01 : f32
    %44 = vector.broadcast %cst_18 : f32 to vector<8x1xf32>
    %45 = arith.divf %43, %44 : vector<8x1xf32>
    %46 = math.rsqrt %45 : vector<8x1xf32>
    %47 = vector.broadcast %46 : vector<8x1xf32> to vector<8x96xf32>
    %48 = arith.mulf %4, %47 : vector<8x96xf32>
    %c0_19 = arith.constant 0 : index
    %c0_20 = arith.constant 0 : index
    %c0_21 = arith.constant 0 : index
    %49 = vector.load %arg10[%c0_19, %c0_20, %c0_21] : memref<1x32x32xbf16, #tpu.memory_space<vmem>>, vector<1x32x32xbf16>
    %50 = vector.shape_cast %49 : vector<1x32x32xbf16> to vector<32x32xbf16>
    %51 = arith.truncf %31 : vector<8x32xf32> to vector<8x32xbf16>
    %cst_22 = arith.constant dense<0.000000e+00> : vector<8x32xf32>
    %52 = tpu.matmul %51, %50, %cst_22 {dimension_numbers = #tpu.dot_dimension_numbers<[1], [0], [0], [1], [0, 0, 1, 1], [], []>} : vector<8x32xbf16>, vector<32x32xbf16>, vector<8x32xf32> -> vector<8x32xf32>
    %c0_23 = arith.constant 0 : index
    %c0_24 = arith.constant 0 : index
    %c0_25 = arith.constant 0 : index
    %53 = vector.load %arg11[%c0_23, %c0_24, %c0_25] : memref<1x1x32xf32, #tpu.memory_space<vmem>>, vector<1x1x32xf32>
    %54 = vector.shape_cast %53 : vector<1x1x32xf32> to vector<1x32xf32>
    %55 = vector.broadcast %54 : vector<1x32xf32> to vector<8x32xf32>
    %56 = arith.addf %52, %55 : vector<8x32xf32>
    %c0_26 = arith.constant 0 : index
    %c0_27 = arith.constant 0 : index
    %c0_28 = arith.constant 0 : index
    %57 = vector.load %arg12[%c0_26, %c0_27, %c0_28] : memref<1x96x96xbf16, #tpu.memory_space<vmem>>, vector<1x96x96xbf16>
    %58 = vector.shape_cast %57 : vector<1x96x96xbf16> to vector<96x96xbf16>
    %59 = arith.truncf %48 : vector<8x96xf32> to vector<8x96xbf16>
    %cst_29 = arith.constant dense<0.000000e+00> : vector<8x96xf32>
    %60 = tpu.matmul %59, %58, %cst_29 {dimension_numbers = #tpu.dot_dimension_numbers<[1], [0], [0], [1], [0, 0, 1, 1], [], []>} : vector<8x96xbf16>, vector<96x96xbf16>, vector<8x96xf32> -> vector<8x96xf32>
    %61 = tpu.concatenate %31, %56, %60, %5 in 1 : vector<8x32xf32>, vector<8x32xf32>, vector<8x96xf32>, vector<8x3xf32> -> vector<8x163xf32>
    %c0_30 = arith.constant 0 : index
    %c0_31 = arith.constant 0 : index
    %62 = vector.load %arg5[%c0_30, %c0_31] : memref<24x8xf32, #tpu.memory_space<vmem>>, vector<24x8xf32>
    %cst_32 = arith.constant dense<0.000000e+00> : vector<24x163xf32>
    %63 = tpu.matmul %62, %61, %cst_32 {dimension_numbers = #tpu.dot_dimension_numbers<[1], [0], [0], [1], [0, 0, 1, 1], [], []>} : vector<24x8xf32>, vector<8x163xf32>, vector<24x163xf32> -> vector<24x163xf32>
    %c0_33 = arith.constant 0 : index
    %c0_34 = arith.constant 0 : index
    %64 = vector.load %arg6[%c0_33, %c0_34] : memref<24x8xf32, #tpu.memory_space<vmem>>, vector<24x8xf32>
    %cst_35 = arith.constant dense<0.000000e+00> : vector<24x163xf32>
    %65 = tpu.matmul %64, %61, %cst_35 {dimension_numbers = #tpu.dot_dimension_numbers<[1], [0], [0], [1], [0, 0, 1, 1], [], []>} : vector<24x8xf32>, vector<8x163xf32>, vector<24x163xf32> -> vector<24x163xf32>
    %66 = vector.extract_strided_slice %63 {offsets = [0, 0], sizes = [24, 32], strides = [1, 1]} : vector<24x163xf32> to vector<24x32xf32>
    %67 = vector.extract_strided_slice %63 {offsets = [0, 32], sizes = [24, 32], strides = [1, 1]} : vector<24x163xf32> to vector<24x32xf32>
    %68 = vector.extract_strided_slice %63 {offsets = [0, 64], sizes = [24, 96], strides = [1, 1]} : vector<24x163xf32> to vector<24x96xf32>
    %69 = vector.extract_strided_slice %63 {offsets = [0, 160], sizes = [24, 3], strides = [1, 1]} : vector<24x163xf32> to vector<24x3xf32>
    %70 = vector.extract_strided_slice %65 {offsets = [0, 0], sizes = [24, 32], strides = [1, 1]} : vector<24x163xf32> to vector<24x32xf32>
    %71 = vector.extract_strided_slice %65 {offsets = [0, 64], sizes = [24, 96], strides = [1, 1]} : vector<24x163xf32> to vector<24x96xf32>
    %72 = vector.extract_strided_slice %65 {offsets = [0, 160], sizes = [24, 3], strides = [1, 1]} : vector<24x163xf32> to vector<24x3xf32>
    %73 = arith.subf %72, %69 : vector<24x3xf32>
    %c0_36 = arith.constant 0 : index
    %c0_37 = arith.constant 0 : index
    %74 = vector.load %arg3[%c0_36, %c0_37] : memref<24x8xf32, #tpu.memory_space<vmem>>, vector<24x8xf32>
    %75 = tpu.concatenate %70, %66, %74 in 1 : vector<24x32xf32>, vector<24x32xf32>, vector<24x8xf32> -> vector<24x72xf32>
    %c0_38 = arith.constant 0 : index
    %c0_39 = arith.constant 0 : index
    %c0_40 = arith.constant 0 : index
    %76 = vector.load %arg13[%c0_38, %c0_39, %c0_40] : memref<1x72x97xbf16, #tpu.memory_space<vmem>>, vector<1x72x97xbf16>
    %77 = vector.shape_cast %76 : vector<1x72x97xbf16> to vector<72x97xbf16>
    %78 = arith.truncf %75 : vector<24x72xf32> to vector<24x72xbf16>
    %cst_41 = arith.constant dense<0.000000e+00> : vector<24x97xf32>
    %79 = tpu.matmul %78, %77, %cst_41 {dimension_numbers = #tpu.dot_dimension_numbers<[1], [0], [0], [1], [0, 0, 1, 1], [], []>} : vector<24x72xbf16>, vector<72x97xbf16>, vector<24x97xf32> -> vector<24x97xf32>
    %c0_42 = arith.constant 0 : index
    %c0_43 = arith.constant 0 : index
    %c0_44 = arith.constant 0 : index
    %80 = vector.load %arg14[%c0_42, %c0_43, %c0_44] : memref<1x1x97xf32, #tpu.memory_space<vmem>>, vector<1x1x97xf32>
    %81 = vector.shape_cast %80 : vector<1x1x97xf32> to vector<1x97xf32>
    %82 = vector.broadcast %81 : vector<1x97xf32> to vector<24x97xf32>
    %83 = arith.addf %79, %82 : vector<24x97xf32>
    %84 = vector.extract_strided_slice %83 {offsets = [0, 0], sizes = [24, 32], strides = [1, 1]} : vector<24x97xf32> to vector<24x32xf32>
    %85 = vector.extract_strided_slice %83 {offsets = [0, 32], sizes = [24, 32], strides = [1, 1]} : vector<24x97xf32> to vector<24x32xf32>
    %86 = vector.extract_strided_slice %83 {offsets = [0, 64], sizes = [24, 32], strides = [1, 1]} : vector<24x97xf32> to vector<24x32xf32>
    %87 = vector.extract_strided_slice %83 {offsets = [0, 96], sizes = [24, 1], strides = [1, 1]} : vector<24x97xf32> to vector<24x1xf32>
    %c0_45 = arith.constant 0 : index
    %c0_46 = arith.constant 0 : index
    %88 = vector.load %arg4[%c0_45, %c0_46] : memref<24x3xf32, #tpu.memory_space<vmem>>, vector<24x3xf32>
    %89 = vector.extract_strided_slice %71 {offsets = [0, 0], sizes = [24, 32], strides = [1, 1]} : vector<24x96xf32> to vector<24x32xf32>
    %90 = vector.extract_strided_slice %71 {offsets = [0, 32], sizes = [24, 32], strides = [1, 1]} : vector<24x96xf32> to vector<24x32xf32>
    %91 = vector.extract_strided_slice %71 {offsets = [0, 64], sizes = [24, 32], strides = [1, 1]} : vector<24x96xf32> to vector<24x32xf32>
    %92 = vector.extract_strided_slice %68 {offsets = [0, 0], sizes = [24, 32], strides = [1, 1]} : vector<24x96xf32> to vector<24x32xf32>
    %93 = vector.extract_strided_slice %68 {offsets = [0, 32], sizes = [24, 32], strides = [1, 1]} : vector<24x96xf32> to vector<24x32xf32>
    %94 = vector.extract_strided_slice %68 {offsets = [0, 64], sizes = [24, 32], strides = [1, 1]} : vector<24x96xf32> to vector<24x32xf32>
    %95 = arith.mulf %90, %94 : vector<24x32xf32>
    %96 = arith.mulf %91, %93 : vector<24x32xf32>
    %97 = arith.subf %95, %96 : vector<24x32xf32>
    %98 = arith.mulf %91, %92 : vector<24x32xf32>
    %99 = arith.mulf %89, %94 : vector<24x32xf32>
    %100 = arith.subf %98, %99 : vector<24x32xf32>
    %101 = arith.mulf %89, %93 : vector<24x32xf32>
    %102 = arith.mulf %90, %92 : vector<24x32xf32>
    %103 = arith.subf %101, %102 : vector<24x32xf32>
    %104 = arith.mulf %84, %67 : vector<24x32xf32>
    %105 = arith.mulf %85, %97 : vector<24x32xf32>
    %106 = vector.extract_strided_slice %88 {offsets = [0, 0], sizes = [24, 1], strides = [1, 1]} : vector<24x3xf32> to vector<24x1xf32>
    %107 = vector.broadcast %106 : vector<24x1xf32> to vector<24x32xf32>
    %108 = arith.mulf %86, %107 : vector<24x32xf32>
    %109 = arith.addf %105, %108 : vector<24x32xf32>
    %110 = arith.mulf %85, %100 : vector<24x32xf32>
    %111 = vector.extract_strided_slice %88 {offsets = [0, 1], sizes = [24, 1], strides = [1, 1]} : vector<24x3xf32> to vector<24x1xf32>
    %112 = vector.broadcast %111 : vector<24x1xf32> to vector<24x32xf32>
    %113 = arith.mulf %86, %112 : vector<24x32xf32>
    %114 = arith.addf %110, %113 : vector<24x32xf32>
    %115 = arith.mulf %85, %103 : vector<24x32xf32>
    %116 = vector.extract_strided_slice %88 {offsets = [0, 2], sizes = [24, 1], strides = [1, 1]} : vector<24x3xf32> to vector<24x1xf32>
    %117 = vector.broadcast %116 : vector<24x1xf32> to vector<24x32xf32>
    %118 = arith.mulf %86, %117 : vector<24x32xf32>
    %119 = arith.addf %115, %118 : vector<24x32xf32>
    %120 = vector.broadcast %87 : vector<24x1xf32> to vector<24x3xf32>
    %121 = arith.mulf %120, %73 : vector<24x3xf32>
    %122 = tpu.concatenate %104, %109, %114, %119, %121 in 1 : vector<24x32xf32>, vector<24x32xf32>, vector<24x32xf32>, vector<24x32xf32>, vector<24x3xf32> -> vector<24x131xf32>
    %c0_47 = arith.constant 0 : index
    %c0_48 = arith.constant 0 : index
    %123 = vector.load %arg7[%c0_47, %c0_48] : memref<8x24xf32, #tpu.memory_space<vmem>>, vector<8x24xf32>
    %cst_49 = arith.constant dense<0.000000e+00> : vector<8x131xf32>
    %124 = tpu.matmul %123, %122, %cst_49 {dimension_numbers = #tpu.dot_dimension_numbers<[1], [0], [0], [1], [0, 0, 1, 1], [], []>} : vector<8x24xf32>, vector<24x131xf32>, vector<8x131xf32> -> vector<8x131xf32>
    %125 = vector.extract_strided_slice %124 {offsets = [0, 0], sizes = [8, 32], strides = [1, 1]} : vector<8x131xf32> to vector<8x32xf32>
    %126 = arith.addf %125, %31 : vector<8x32xf32>
    %127 = vector.extract_strided_slice %124 {offsets = [0, 32], sizes = [8, 96], strides = [1, 1]} : vector<8x131xf32> to vector<8x96xf32>
    %128 = arith.addf %127, %48 : vector<8x96xf32>
    %129 = vector.extract_strided_slice %124 {offsets = [0, 128], sizes = [8, 3], strides = [1, 1]} : vector<8x131xf32> to vector<8x3xf32>
    %130 = arith.addf %129, %5 : vector<8x3xf32>
    %c0_50 = arith.constant 0 : index
    %c0_51 = arith.constant 0 : index
    %131 = vector.load %arg22[%c0_50, %c0_51] : memref<8x3xf32, #tpu.memory_space<vmem>>, vector<8x3xf32>
    tpu.vector_store %arg22[%c0_50, %c0_51], %130 {strides = array<i32>} : memref<8x3xf32, #tpu.memory_space<vmem>>, vector<8x3xf32>,
    %c0_52 = arith.constant 0 : index
    %c0_53 = arith.constant 0 : index
    %c0_54 = arith.constant 0 : index
    %132 = vector.load %arg15[%c0_52, %c0_53, %c0_54] : memref<1x96x192xbf16, #tpu.memory_space<vmem>>, vector<1x96x192xbf16>
    %133 = vector.shape_cast %132 : vector<1x96x192xbf16> to vector<96x192xbf16>
    %134 = arith.truncf %128 : vector<8x96xf32> to vector<8x96xbf16>
    %cst_55 = arith.constant dense<0.000000e+00> : vector<8x192xf32>
    %135 = tpu.matmul %134, %133, %cst_55 {dimension_numbers = #tpu.dot_dimension_numbers<[1], [0], [0], [1], [0, 0, 1, 1], [], []>} : vector<8x96xbf16>, vector<96x192xbf16>, vector<8x192xf32> -> vector<8x192xf32>
    %136 = vector.extract_strided_slice %135 {offsets = [0, 0], sizes = [8, 96], strides = [1, 1]} : vector<8x192xf32> to vector<8x96xf32>
    %137 = vector.extract_strided_slice %135 {offsets = [0, 96], sizes = [8, 96], strides = [1, 1]} : vector<8x192xf32> to vector<8x96xf32>
    %138 = vector.extract_strided_slice %136 {offsets = [0, 0], sizes = [8, 32], strides = [1, 1]} : vector<8x96xf32> to vector<8x32xf32>
    %139 = arith.mulf %138, %138 : vector<8x32xf32>
    %140 = vector.extract_strided_slice %136 {offsets = [0, 32], sizes = [8, 32], strides = [1, 1]} : vector<8x96xf32> to vector<8x32xf32>
    %141 = arith.mulf %140, %140 : vector<8x32xf32>
    %142 = arith.addf %139, %141 : vector<8x32xf32>
    %143 = vector.extract_strided_slice %136 {offsets = [0, 64], sizes = [8, 32], strides = [1, 1]} : vector<8x96xf32> to vector<8x32xf32>
    %144 = arith.mulf %143, %143 : vector<8x32xf32>
    %145 = arith.addf %142, %144 : vector<8x32xf32>
    %cst_56 = arith.constant 9.99999997E-7 : f32
    %146 = vector.broadcast %cst_56 : f32 to vector<8x32xf32>
    %147 = arith.maximumf %145, %146 : vector<8x32xf32>
    %148 = math.sqrt %147 : vector<8x32xf32>
    %149 = tpu.concatenate %126, %148 in 1 : vector<8x32xf32>, vector<8x32xf32> -> vector<8x64xf32>
    %c0_57 = arith.constant 0 : index
    %c0_58 = arith.constant 0 : index
    %c0_59 = arith.constant 0 : index
    %150 = vector.load %arg16[%c0_57, %c0_58, %c0_59] : memref<1x64x32xbf16, #tpu.memory_space<vmem>>, vector<1x64x32xbf16>
    %151 = vector.shape_cast %150 : vector<1x64x32xbf16> to vector<64x32xbf16>
    %152 = arith.truncf %149 : vector<8x64xf32> to vector<8x64xbf16>
    %cst_60 = arith.constant dense<0.000000e+00> : vector<8x32xf32>
    %153 = tpu.matmul %152, %151, %cst_60 {dimension_numbers = #tpu.dot_dimension_numbers<[1], [0], [0], [1], [0, 0, 1, 1], [], []>} : vector<8x64xbf16>, vector<64x32xbf16>, vector<8x32xf32> -> vector<8x32xf32>
    %c0_61 = arith.constant 0 : index
    %c0_62 = arith.constant 0 : index
    %c0_63 = arith.constant 0 : index
    %154 = vector.load %arg17[%c0_61, %c0_62, %c0_63] : memref<1x1x32xf32, #tpu.memory_space<vmem>>, vector<1x1x32xf32>
    %155 = vector.shape_cast %154 : vector<1x1x32xf32> to vector<1x32xf32>
    %156 = vector.broadcast %155 : vector<1x32xf32> to vector<8x32xf32>
    %157 = arith.addf %153, %156 : vector<8x32xf32>
    %158 = arith.negf %157 : vector<8x32xf32>
    %159 = math.exp %158 : vector<8x32xf32>
    %cst_64 = arith.constant 1.000000e+00 : f32
    %160 = vector.broadcast %cst_64 : f32 to vector<8x32xf32>
    %161 = arith.addf %160, %159 : vector<8x32xf32>
    %162 = arith.divf %160, %161 : vector<8x32xf32>
    %163 = arith.mulf %157, %162 : vector<8x32xf32>
    %c0_65 = arith.constant 0 : index
    %c0_66 = arith.constant 0 : index
    %c0_67 = arith.constant 0 : index
    %164 = vector.load %arg18[%c0_65, %c0_66, %c0_67] : memref<1x32x64xbf16, #tpu.memory_space<vmem>>, vector<1x32x64xbf16>
    %165 = vector.shape_cast %164 : vector<1x32x64xbf16> to vector<32x64xbf16>
    %166 = arith.truncf %163 : vector<8x32xf32> to vector<8x32xbf16>
    %cst_68 = arith.constant dense<0.000000e+00> : vector<8x64xf32>
    %167 = tpu.matmul %166, %165, %cst_68 {dimension_numbers = #tpu.dot_dimension_numbers<[1], [0], [0], [1], [0, 0, 1, 1], [], []>} : vector<8x32xbf16>, vector<32x64xbf16>, vector<8x64xf32> -> vector<8x64xf32>
    %c0_69 = arith.constant 0 : index
    %c0_70 = arith.constant 0 : index
    %c0_71 = arith.constant 0 : index
    %168 = vector.load %arg19[%c0_69, %c0_70, %c0_71] : memref<1x1x64xf32, #tpu.memory_space<vmem>>, vector<1x1x64xf32>
    %169 = vector.shape_cast %168 : vector<1x1x64xf32> to vector<1x64xf32>
    %170 = vector.broadcast %169 : vector<1x64xf32> to vector<8x64xf32>
    %171 = arith.addf %167, %170 : vector<8x64xf32>
    %172 = vector.extract_strided_slice %171 {offsets = [0, 0], sizes = [8, 32], strides = [1, 1]} : vector<8x64xf32> to vector<8x32xf32>
    %173 = vector.extract_strided_slice %171 {offsets = [0, 32], sizes = [8, 32], strides = [1, 1]} : vector<8x64xf32> to vector<8x32xf32>
    %174 = arith.addf %173, %126 : vector<8x32xf32>
    %c0_72 = arith.constant 0 : index
    %c0_73 = arith.constant 0 : index
    %175 = vector.load %arg20[%c0_72, %c0_73] : memref<8x32xf32, #tpu.memory_space<vmem>>, vector<8x32xf32>
    tpu.vector_store %arg20[%c0_72, %c0_73], %174 {strides = array<i32>} : memref<8x32xf32, #tpu.memory_space<vmem>>, vector<8x32xf32>,
    %176 = tpu.concatenate %172, %172, %172 in 1 : vector<8x32xf32>, vector<8x32xf32>, vector<8x32xf32> -> vector<8x96xf32>
    %177 = arith.mulf %176, %137 : vector<8x96xf32>
    %178 = arith.addf %177, %128 : vector<8x96xf32>
    %c0_74 = arith.constant 0 : index
    %c0_75 = arith.constant 0 : index
    %179 = vector.load %arg21[%c0_74, %c0_75] : memref<8x96xf32, #tpu.memory_space<vmem>>, vector<8x96xf32>
    tpu.vector_store %arg21[%c0_74, %c0_75], %178 {strides = array<i32>} : memref<8x96xf32, #tpu.memory_space<vmem>>, vector<8x96xf32>,
    return
  }
  func.func @transform_0(%arg0: i32) -> (i32, i32) {
    %c0_i32 = arith.constant 0 : i32
    %c0_i32_0 = arith.constant 0 : i32
    %c0_i32_1 = arith.constant 0 : i32
    return %c0_i32, %c0_i32_0 : i32, i32
  }
  func.func @transform_1(%arg0: i32) -> (i32, i32) {
    %c0_i32 = arith.constant 0 : i32
    %c0_i32_0 = arith.constant 0 : i32
    %c0_i32_1 = arith.constant 0 : i32
    return %c0_i32, %c0_i32_0 : i32, i32
  }
  func.func @transform_2(%arg0: i32) -> (i32, i32) {
    %c0_i32 = arith.constant 0 : i32
    %c0_i32_0 = arith.constant 0 : i32
    %c0_i32_1 = arith.constant 0 : i32
    return %c0_i32, %c0_i32_0 : i32, i32
  }
  func.func @transform_3(%arg0: i32) -> (i32, i32) {
    %c0_i32 = arith.constant 0 : i32
    %c0_i32_0 = arith.constant 0 : i32
    %c0_i32_1 = arith.constant 0 : i32
    return %c0_i32, %c0_i32_0 : i32, i32
  }
  func.func @transform_4(%arg0: i32) -> (i32, i32) {
    %c0_i32 = arith.constant 0 : i32
    %c0_i32_0 = arith.constant 0 : i32
    %c0_i32_1 = arith.constant 0 : i32
    return %c0_i32, %c0_i32_0 : i32, i32
  }
  func.func @transform_5(%arg0: i32) -> (i32, i32) {
    %c0_i32 = arith.constant 0 : i32
    %c0_i32_0 = arith.constant 0 : i32
    %c0_i32_1 = arith.constant 0 : i32
    return %c0_i32, %c0_i32_0 : i32, i32
  }
  func.func @transform_6(%arg0: i32) -> (i32, i32) {
    %c0_i32 = arith.constant 0 : i32
    %c0_i32_0 = arith.constant 0 : i32
    %c0_i32_1 = arith.constant 0 : i32
    return %c0_i32, %c0_i32_0 : i32, i32
  }
  func.func @transform_7(%arg0: i32) -> (i32, i32, i32) {
    %c0_i32 = arith.constant 0 : i32
    %c0_i32_0 = arith.constant 0 : i32
    %c0_i32_1 = arith.constant 0 : i32
    return %arg0, %c0_i32, %c0_i32_0 : i32, i32, i32
  }
  func.func @transform_8(%arg0: i32) -> (i32, i32, i32) {
    %c0_i32 = arith.constant 0 : i32
    %c0_i32_0 = arith.constant 0 : i32
    %c0_i32_1 = arith.constant 0 : i32
    return %arg0, %c0_i32, %c0_i32_0 : i32, i32, i32
  }
  func.func @transform_9(%arg0: i32) -> (i32, i32, i32) {
    %c0_i32 = arith.constant 0 : i32
    %c0_i32_0 = arith.constant 0 : i32
    %c0_i32_1 = arith.constant 0 : i32
    return %arg0, %c0_i32, %c0_i32_0 : i32, i32, i32
  }
  func.func @transform_10(%arg0: i32) -> (i32, i32, i32) {
    %c0_i32 = arith.constant 0 : i32
    %c0_i32_0 = arith.constant 0 : i32
    %c0_i32_1 = arith.constant 0 : i32
    return %arg0, %c0_i32, %c0_i32_0 : i32, i32, i32
  }
  func.func @transform_11(%arg0: i32) -> (i32, i32, i32) {
    %c0_i32 = arith.constant 0 : i32
    %c0_i32_0 = arith.constant 0 : i32
    %c0_i32_1 = arith.constant 0 : i32
    return %arg0, %c0_i32, %c0_i32_0 : i32, i32, i32
  }
  func.func @transform_12(%arg0: i32) -> (i32, i32, i32) {
    %c0_i32 = arith.constant 0 : i32
    %c0_i32_0 = arith.constant 0 : i32
    %c0_i32_1 = arith.constant 0 : i32
    return %arg0, %c0_i32, %c0_i32_0 : i32, i32, i32
  }
  func.func @transform_13(%arg0: i32) -> (i32, i32, i32) {
    %c0_i32 = arith.constant 0 : i32
    %c0_i32_0 = arith.constant 0 : i32
    %c0_i32_1 = arith.constant 0 : i32
    return %arg0, %c0_i32, %c0_i32_0 : i32, i32, i32
  }
  func.func @transform_14(%arg0: i32) -> (i32, i32, i32) {
    %c0_i32 = arith.constant 0 : i32
    %c0_i32_0 = arith.constant 0 : i32
    %c0_i32_1 = arith.constant 0 : i32
    return %arg0, %c0_i32, %c0_i32_0 : i32, i32, i32
  }
  func.func @transform_15(%arg0: i32) -> (i32, i32, i32) {
    %c0_i32 = arith.constant 0 : i32
    %c0_i32_0 = arith.constant 0 : i32
    %c0_i32_1 = arith.constant 0 : i32
    return %arg0, %c0_i32, %c0_i32_0 : i32, i32, i32
  }
  func.func @transform_16(%arg0: i32) -> (i32, i32, i32) {
    %c0_i32 = arith.constant 0 : i32
    %c0_i32_0 = arith.constant 0 : i32
    %c0_i32_1 = arith.constant 0 : i32
    return %arg0, %c0_i32, %c0_i32_0 : i32, i32, i32
  }
  func.func @transform_17(%arg0: i32) -> (i32, i32, i32) {
    %c0_i32 = arith.constant 0 : i32
    %c0_i32_0 = arith.constant 0 : i32
    %c0_i32_1 = arith.constant 0 : i32
    return %arg0, %c0_i32, %c0_i32_0 : i32, i32, i32
  }
  func.func @transform_18(%arg0: i32) -> (i32, i32, i32) {
    %c0_i32 = arith.constant 0 : i32
    %c0_i32_0 = arith.constant 0 : i32
    %c0_i32_1 = arith.constant 0 : i32
    return %arg0, %c0_i32, %c0_i32_0 : i32, i32, i32
  }
  func.func @transform_19(%arg0: i32) -> (i32, i32) {
    %c0_i32 = arith.constant 0 : i32
    %c0_i32_0 = arith.constant 0 : i32
    %c0_i32_1 = arith.constant 0 : i32
    return %c0_i32, %c0_i32_0 : i32, i32
  }
  func.func @transform_20(%arg0: i32) -> (i32, i32) {
    %c0_i32 = arith.constant 0 : i32
    %c0_i32_0 = arith.constant 0 : i32
    %c0_i32_1 = arith.constant 0 : i32
    return %c0_i32, %c0_i32_0 : i32, i32
  }
  func.func @transform_21(%arg0: i32) -> (i32, i32) {
    %c0_i32 = arith.constant 0 : i32
    %c0_i32_0 = arith.constant 0 : i32
    %c0_i32_1 = arith.constant 0 : i32
    return %c0_i32, %c0_i32_0 : i32, i32
  }
}

</mosaic_0001>

<llo_original>
// kernel: encoder_forward.3
$region0: #{encoder_forward.3}
  #allocation0 [shape = 'u32[]', space=smem, size = 0x4, offset = 0x4, fixed_abs, tag = 'smem constant byte address 0x4 - core index']
  #allocation1 [shape = 'u32[72,128]{1,0:T(1,128)}', space=vmem, size = 0x9000, scoped, tag = 'internal scratch']
  %s0 = inlined_call_operand.vmem [shape: f32[8,32], index: 0, kind: input, shape index: {}]
  %s1 = inlined_call_operand.vmem [shape: f32[8,96], index: 1, kind: input, shape index: {}]
  %s2 = inlined_call_operand.vmem [shape: f32[8,3], index: 2, kind: input, shape index: {}]
  %s3 = inlined_call_operand.vmem [shape: f32[2,8], index: 3, kind: input, shape index: {}]
  %s4 = inlined_call_operand.vmem [shape: bf16[96,102], index: 4, kind: input, shape index: {}]
  %s5 = inlined_call_operand.vmem [shape: bf16[64,32], index: 5, kind: input, shape index: {}]
  %s6 = inlined_call_operand.vmem [shape: f32[1,32], index: 6, kind: input, shape index: {}]
  %s7 = inlined_call_operand.vmem [shape: bf16[32,18], index: 7, kind: input, shape index: {}]
  %s8 = inlined_call_operand.vmem [shape: f32[1,18], index: 8, kind: input, shape index: {}]
  %s9 = inlined_call_operand.hbm [shape: f32[2,8], index: 9, kind: output, shape index: {0}]
  %s10 = inlined_call_operand.hbm [shape: f32[8,8], index: 10, kind: output, shape index: {1}]
  %s11 = inlined_call_operand.vmem [shape: f32[2,6], index: 11, kind: output, shape index: {2}]
  %s12 = inlined_call_operand.hbm [shape: f32[2,3], index: 12, kind: output, shape index: {3}]
  %13 = xla_tuple %s9, %s10, %s11, %s12
  %s14 = sld [smem:[#allocation0]]
  $region70: #{encoder_forward.3} parent=0
    _
  %s16 = ssub.s32 1, %s14
  %s17 = scalar_select 0, %s16, %s14
  $region1: #{encoder_forward.3} parent=0
    #allocation2 [shape = 'u8[1024]{0}', space=vmem, size = 0x400, scoped, tag = 'output window, operand 0, single buffered']
    #allocation3 [shape = 's32[1]{0}', space=sflag, size = 0x4, scoped, tag = 'scoped memory for encoder_forward.3']
    #allocation4 [shape = 'u8[4096]{0}', space=vmem, size = 0x1000, scoped, tag = 'output window, operand 1, single buffered']
    #allocation5 [shape = 's32[1]{0}', space=sflag, size = 0x4, scoped, tag = 'scoped memory for encoder_forward.3']
    #allocation6 [shape = 'u8[1024]{0}', space=vmem, size = 0x400, scoped, tag = 'output window, operand 3, single buffered']
    %18 = vsyncpa [#allocation3], 0
    %19 = vsyncpa [#allocation5], 0
    // Predicated region
    $region2: #{encoder_forward.3} parent=1 // pred_check
      _
    $region3: #{encoder_forward.3} parent=1 // pred_check_branch
      %21 = sbr.rel (0) target = $region5
    $region4: #{encoder_forward.3} parent=1 // pred_region
      _
    $region5: #{encoder_forward.3} parent=1 // pred_fallthru
      _
    // Predicated region
    $region6: #{encoder_forward.3} parent=1 // pred_check
      _
    $region7: #{encoder_forward.3} parent=1 // pred_check_branch
      %23 = sbr.rel (0) target = $region9
    $region8: #{encoder_forward.3} parent=1 // pred_region
      _
    $region9: #{encoder_forward.3} parent=1 // pred_fallthru
      _
    // Predicated region
    $region10: #{encoder_forward.3} parent=1 // pred_check
      _
    $region11: #{encoder_forward.3} parent=1 // pred_check_branch
      %25 = sbr.rel (0) target = $region13
    $region12: #{encoder_forward.3} parent=1 // pred_region
      _
    $region13: #{encoder_forward.3} parent=1 // pred_fallthru
      _
    // Predicated region
    $region14: #{encoder_forward.3} parent=1 // pred_check
      _
    $region15: #{encoder_forward.3} parent=1 // pred_check_branch
      %27 = sbr.rel (0) target = $region17
    $region16: #{encoder_forward.3} parent=1 // pred_region
      _
    $region17: #{encoder_forward.3} parent=1 // pred_fallthru
      _
    // Predicated region
    $region18: #{encoder_forward.3} parent=1 // pred_check
      _
    $region19: #{encoder_forward.3} parent=1 // pred_check_branch
      %29 = sbr.rel (0) target = $region21
    $region20: #{encoder_forward.3} parent=1 // pred_region
      _
    $region21: #{encoder_forward.3} parent=1 // pred_fallthru
      _
    // Predicated region
    $region22: #{encoder_forward.3} parent=1 // pred_check
      _
    $region23: #{encoder_forward.3} parent=1 // pred_check_branch
      %31 = sbr.rel (0) target = $region25
    $region24: #{encoder_forward.3} parent=1 // pred_region
      _
    $region25: #{encoder_forward.3} parent=1 // pred_fallthru
      _
    // Predicated region
    $region26: #{encoder_forward.3} parent=1 // pred_check
      _
    $region27: #{encoder_forward.3} parent=1 // pred_check_branch
      %33 = sbr.rel (0) target = $region29
    $region28: #{encoder_forward.3} parent=1 // pred_region
      _
    $region29: #{encoder_forward.3} parent=1 // pred_fallthru
      _
    // Predicated region
    $region30: #{encoder_forward.3} parent=1 // pred_check
      _
    $region31: #{encoder_forward.3} parent=1 // pred_check_branch
      %35 = sbr.rel (0) target = $region33
    $region32: #{encoder_forward.3} parent=1 // pred_region
      _
    $region33: #{encoder_forward.3} parent=1 // pred_fallthru
      _
    // Predicated region
    $region34: #{encoder_forward.3} parent=1 // pred_check
      _
    $region35: #{encoder_forward.3} parent=1 // pred_check_branch
      %37 = sbr.rel (0) target = $region37
    $region36: #{encoder_forward.3} parent=1 // pred_region
      _
    $region37: #{encoder_forward.3} parent=1 // pred_fallthru
      _
    %v39 = vld [vmem:[%s1] sm:$0xff]
    %v40 = vld [vmem:[%s4] sm:$0xf]
    %v41 = vld [vmem:[%s4 + $0x4] sm:$0xf]
    %v42 = vld [vmem:[%s4 + $0x8] sm:$0xf]
    %v43 = vld [vmem:[%s4 + $0xc] sm:$0xf]
    %v44 = vld [vmem:[%s4 + $0x10] sm:$0xf]
    %v45 = vld [vmem:[%s4 + $0x14] sm:$0xf]
    %v46 = vld [vmem:[%s4 + $0x18] sm:$0xf]
    %v47 = vld [vmem:[%s4 + $0x1c] sm:$0xf]
    %v48 = vld [vmem:[%s4 + $0x20] sm:$0xf]
    %v49 = vld [vmem:[%s4 + $0x24] sm:$0xf]
    %v50 = vld [vmem:[%s4 + $0x28] sm:$0xf]
    %v51 = vld [vmem:[%s4 + $0x2c] sm:$0xf]
    %v52 = vpack.c.bf16 %v39, %v39
    %v65 = vunpack.c.l.b16 %v40
    %v66 = vunpack.c.l.b16 %v41
    %v67 = vunpack.c.l.b16 %v42
    %v68 = vunpack.c.l.b16 %v43
    %v69 = vunpack.c.l.b16 %v44
    %v70 = vunpack.c.l.b16 %v45
    %v71 = vunpack.c.l.b16 %v46
    %v72 = vunpack.c.l.b16 %v47
    %v73 = vunpack.c.l.b16 %v48
    %v74 = vunpack.c.l.b16 %v49
    %v75 = vunpack.c.l.b16 %v50
    %v76 = vunpack.c.l.b16 %v51
    %v77 = vpack.c.b16 %v66, %v65
    %v78 = vpack.c.b16 %v68, %v67
    %v79 = vpack.c.b16 %v70, %v69
    %v80 = vpack.c.b16 %v72, %v71
    %v81 = vpack.c.b16 %v74, %v73
    %v82 = vpack.c.b16 %v76, %v75
    %vm89 = vcmask 785408
    %v91 = vsel %vm89, %v52, 0
    %93 = vmatpush.bf16.msra.mxu0 0
    %94 = vmatpush.bf16.msra.mxu0 0
    %95 = vmatpush.bf16.msra.mxu0 %v82
    %96 = vmatpush.bf16.msra.mxu0 %v81
    %97 = vmatpush.bf16.msra.mxu0 %v80
    %98 = vmatpush.bf16.msra.mxu0 %v79
    %99 = vmatpush.bf16.msra.mxu0 %v78
    %100 = vmatpush.bf16.msra.mxu0 %v77
    %101 = vmatmul.bf16.gmra.mxu0 %v91
    %v102 = vpop.f32.mrf.mxu0
    %v103 = vadd.f32 0.0, %v102
    %v104 = vpop.f32.mrf.mxu0
    %105 = vdwg.mxu0
    %v106 = vmul.f32 %v103, %v103
    %108 = vrot.lane.b32.xlu0 %v106, 96
    %v109 = vpop.permute.xlu0 %108
    %v111 = vadd.f32 %v106, %v109
    %112 = vrot.lane.b32.xlu0 %v106, 64
    %v113 = vpop.permute.xlu0 %112
    %v115 = vadd.f32 %v111, %v113
    %v116 = vmax.f32 %v115, 1e-06
    %v117 = vrsqrt.pop %v116
    %v118 = vmul.f32 %v117, %v116
    %v119 = vmul.f32 %v118, %v117
    %v120 = vmul.f32 0.5, %v119
    %v121 = vsub.f32 1.5, %v120
    %v122 = vmul.f32 %v117, %v121
    %v123 = vmul.f32 %v116, %v122
    %vm124 = vcmp.eq.f32.partialorder %v116, inf
    %v125 = vsel %vm124, %v116, %v123
    %vm126 = vcmp.eq.f32.partialorder %v116, 0.0
    %v127 = vand.u32 %v116, 2147483648
    %v128 = vsel %vm126, %v127, %v125
    %v129 = vld [vmem:[%s0] sm:$0xff]
    %131 = vrot.lane.b32.xlu0 %v128, 32
    %v132 = vpop.permute.xlu0 %131
    %vm134 = vcmask 261120
    %v135 = vsel %vm134, %v129, %v132
    %v136 = vld [vmem:[%s5] sm:$0xf]
    %v137 = vld [vmem:[%s5 + $0x4] sm:$0xf]
    %v138 = vld [vmem:[%s5 + $0x8] sm:$0xf]
    %v139 = vld [vmem:[%s5 + $0xc] sm:$0xf]
    %v140 = vld [vmem:[%s5 + $0x10] sm:$0xf]
    %v141 = vld [vmem:[%s5 + $0x14] sm:$0xf]
    %v142 = vld [vmem:[%s5 + $0x18] sm:$0xf]
    %v143 = vld [vmem:[%s5 + $0x1c] sm:$0xf]
    %v144 = vpack.c.bf16 %v135, %v135
    %v145 = vld [vmem:[%s6] sm:$0x1]
    %v147 = vperm.slane %v145, 0
    %v157 = vunpack.c.l.b16 %v136
    %v158 = vunpack.c.l.b16 %v137
    %v159 = vunpack.c.l.b16 %v138
    %v160 = vunpack.c.l.b16 %v139
    %v161 = vunpack.c.l.b16 %v140
    %v162 = vunpack.c.l.b16 %v141
    %v163 = vunpack.c.l.b16 %v142
    %v164 = vunpack.c.l.b16 %v143
    %v165 = vpack.c.b16 %v158, %v157
    %v166 = vpack.c.b16 %v160, %v159
    %v167 = vpack.c.b16 %v162, %v161
    %v168 = vpack.c.b16 %v164, %v163
    %vm173 = vcmask 523264
    %v175 = vsel %vm173, %v144, 0
    %177 = vmatpush.bf16.msra.mxu0 0
    %178 = vmatpush.bf16.msra.mxu0 0
    %179 = vmatpush.bf16.msra.mxu0 0
    %180 = vmatpush.bf16.msra.mxu0 0
    %181 = vmatpush.bf16.msra.mxu0 %v168
    %182 = vmatpush.bf16.msra.mxu0 %v167
    %183 = vmatpush.bf16.msra.mxu0 %v166
    %184 = vmatpush.bf16.msra.mxu0 %v165
    %185 = vmatmul.bf16.gmra.mxu0 %v175
    %v186 = vpop.f32.mrf.mxu0
    %v187 = vadd.f32 %v147, %v186
    %v188 = vpop.f32.mrf.mxu0
    %189 = vdwg.mxu0
    %v190 = vxor.u32 %v187, 2147483648
    %v191 = vmul.f32 %v190, 1.442695
    %v192 = vpow.pop %v191
    %v193 = vadd.f32 %v192, 1.0
    %v194 = vrcp.pop %v193
    %v195 = vmul.f32 %v193, %v194
    %v196 = vsub.f32 1.0, %v195
    %v197 = vmul.f32 %v194, %v196
    %v198 = vadd.f32 %v194, %v197
    %vm199 = vweird.f32 %v193
    %vm200 = vweird.f32 %v194
    %vm201 = vmor %vm199, %vm200
    %v202 = vsel %vm201, %v194, %v198
    %v203 = vand.u32 2147483647, %v193
    %vm204 = vcmp.eq.f32.partialorder %v203, 8.507059e+37
    %v205 = vand.u32 %v193, 2147483648
    %v206 = vor.u32 1.1754944e-38, %v205
    %v207 = vsel %vm204, %v206, %v202
    %v208 = vmul.f32 1.0, %v207
    %v209 = vmul.f32 %v187, %v208
    %v210 = vld [vmem:[%s7] sm:$0xf]
    %v211 = vld [vmem:[%s7 + $0x4] sm:$0xf]
    %v212 = vld [vmem:[%s7 + $0x8] sm:$0xf]
    %v213 = vld [vmem:[%s7 + $0xc] sm:$0xf]
    %v214 = vpack.c.bf16 %v209, %v209
    %v215 = vld [vmem:[%s8] sm:$0x1]
    %v217 = vperm.slane %v215, 0
    %v223 = vunpack.c.l.b16 %v210
    %v224 = vunpack.c.l.b16 %v211
    %v225 = vunpack.c.l.b16 %v212
    %v226 = vunpack.c.l.b16 %v213
    %v227 = vpack.c.b16 %v224, %v223
    %v228 = vpack.c.b16 %v226, %v225
    %v232 = vsel %vm134, %v214, 0
    %234 = vmatpush.bf16.msra.mxu0 0
    %235 = vmatpush.bf16.msra.mxu0 0
    %236 = vmatpush.bf16.msra.mxu0 0
    %237 = vmatpush.bf16.msra.mxu0 0
    %238 = vmatpush.bf16.msra.mxu0 0
    %239 = vmatpush.bf16.msra.mxu0 0
    %240 = vmatpush.bf16.msra.mxu0 %v228
    %241 = vmatpush.bf16.msra.mxu0 %v227
    %242 = vmatmul.bf16.gmra.mxu0 %v232
    %v243 = vpop.f32.mrf.mxu0
    %v244 = vadd.f32 %v217, %v243
    %v245 = vpop.f32.mrf.mxu0
    %246 = vdwg.mxu0
    %248 = vrot.lane.b32.xlu0 %v244, 118
    %v249 = vpop.permute.xlu0 %248
    %vm251 = vcmask 64512
    %252 = vst.msk [vmem:[#allocation4] sm:$0xff] %vm251, %v249
    %v253 = vld [vmem:[%s3] sm:$0x3]
    %254 = vrot.lane.b32.xlu0 %v244, 126
    %v255 = vpop.permute.xlu0 %254
    %v258 = vsel %vm251, %v253, 0
    %260 = vmatpush.msra.mxu0 0.0
    %261 = vmatpush.msra.mxu0 0.0
    %262 = vmatpush.msra.mxu0 0.0
    %263 = vmatpush.msra.mxu0 0.0
    %264 = vmatpush.msra.mxu0 0.0
    %265 = vmatpush.msra.mxu0 0.0
    %266 = vmatpush.msra.mxu0 0.0
    %267 = vmatpush.msra.mxu0 0.0
    %268 = vmatpush.msra.mxu0 0.0
    %269 = vmatpush.msra.mxu0 0.0
    %270 = vmatpush.msra.mxu0 0.0
    %271 = vmatpush.msra.mxu0 0.0
    %272 = vmatpush.msra.mxu0 0.0
    %273 = vmatpush.msra.mxu0 0.0
    %274 = vmatpush.msra.mxu0 0.0
    %275 = vmatpush.msra.mxu0 %v255
    %276 = vmatmul.f32.gmra.mxu0 %v258
    %v277 = vpop.f32.mrf.mxu0
    %v278 = vadd.f32 0.0, %v277
    %279 = vdwg.mxu0
    %vm280 = vcmask 58368
    %281 = vst.msk [vmem:[#allocation2] sm:$0x3] %vm280, %v278
    %282 = vrot.lane.b32.xlu0 %v244, 2
    %v283 = vpop.permute.xlu0 %282
    %285 = vrot.lane.b32.xlu0 %v244, 4
    %v286 = vpop.permute.xlu0 %285
    %vm288 = vcmask 15360
    %v289 = vsel %vm288, %v244, %v283
    %vm290 = vcmask 31744
    %v291 = vsel %vm290, %v289, %v286
    %293 = vrot.lane.b32.xlu0 %v103, 32
    %v294 = vpop.permute.xlu0 %293
    %v296 = vmul.f32 %v291, %v294
    %297 = vmatpush.msra.mxu0 0.0
    %298 = vmatpush.msra.mxu0 0.0
    %299 = vmatpush.msra.mxu0 0.0
    %300 = vmatpush.msra.mxu0 0.0
    %301 = vmatpush.msra.mxu0 0.0
    %302 = vmatpush.msra.mxu0 0.0
    %303 = vmatpush.msra.mxu0 0.0
    %304 = vmatpush.msra.mxu0 0.0
    %305 = vmatpush.msra.mxu0 0.0
    %306 = vmatpush.msra.mxu0 0.0
    %307 = vmatpush.msra.mxu0 0.0
    %308 = vmatpush.msra.mxu0 0.0
    %309 = vmatpush.msra.mxu0 0.0
    %310 = vmatpush.msra.mxu0 0.0
    %311 = vmatpush.msra.mxu0 0.0
    %312 = vmatpush.msra.mxu0 %v296
    %313 = vmatmul.f32.gmra.mxu0 %v258
    %v314 = vpop.f32.mrf.mxu0
    %v315 = vadd.f32 0.0, %v314
    %316 = vdwg.mxu0
    %vm317 = vcmask 41984
    %318 = vst.msk [vmem:[%s11] sm:$0x3] %vm317, %v315
    %v319 = vld [vmem:[%s2] sm:$0xff]
    %320 = vmatpush.msra.mxu0 0.0
    %321 = vmatpush.msra.mxu0 0.0
    %322 = vmatpush.msra.mxu0 0.0
    %323 = vmatpush.msra.mxu0 0.0
    %324 = vmatpush.msra.mxu0 0.0
    %325 = vmatpush.msra.mxu0 0.0
    %326 = vmatpush.msra.mxu0 0.0
    %327 = vmatpush.msra.mxu0 0.0
    %328 = vmatpush.msra.mxu0 0.0
    %329 = vmatpush.msra.mxu0 0.0
    %330 = vmatpush.msra.mxu0 0.0
    %331 = vmatpush.msra.mxu0 0.0
    %332 = vmatpush.msra.mxu0 0.0
    %333 = vmatpush.msra.mxu0 0.0
    %334 = vmatpush.msra.mxu0 0.0
    %335 = vmatpush.msra.mxu0 %v319
    %336 = vmatmul.f32.gmra.mxu0 %v258
    %v337 = vpop.f32.mrf.mxu0
    %v338 = vadd.f32 0.0, %v337
    %339 = vdwg.mxu0
    %vm340 = vcmask 17408
    %341 = vst.msk [vmem:[#allocation6] sm:$0x3] %vm340, %v338
    // Predicated region
    $region38: #{encoder_forward.3} parent=1 // pred_check
      _
    $region39: #{encoder_forward.3} parent=1 // pred_check_branch
      %343 = sbr.rel (0) target = $region41
    $region40: #{encoder_forward.3} parent=1 // pred_region
      %345 = vsyncadd [#allocation3], 0
      %s347 = sshll.u32 [#allocation2], 4
      %s348 = int_to_ptr.vmem [resolvable:$true] %s347
      %s349 = sshll.u32 %s9, 4
      %s350 = int_to_ptr.hbm [resolvable:$true] %s349
      %352 = dma.vmem_to_hbm [thread:$0]  %s348, 32, %s350, [#allocation3]
    $region41: #{encoder_forward.3} parent=1 // pred_fallthru
      _
    // Predicated region
    $region42: #{encoder_forward.3} parent=1 // pred_check
      _
    $region43: #{encoder_forward.3} parent=1 // pred_check_branch
      %354 = sbr.rel (0) target = $region45
    $region44: #{encoder_forward.3} parent=1 // pred_region
      %356 = vsyncadd [#allocation5], 0
      %s358 = sshll.u32 [#allocation4], 4
      %s359 = int_to_ptr.vmem [resolvable:$true] %s358
      %s360 = sshll.u32 %s10, 4
      %s361 = int_to_ptr.hbm [resolvable:$true] %s360
      %363 = dma.vmem_to_hbm [thread:$0]  %s359, 128, %s361, [#allocation5]
    $region45: #{encoder_forward.3} parent=1 // pred_fallthru
      _
    // Predicated region
    $region46: #{encoder_forward.3} parent=1 // pred_check
      _
    $region47: #{encoder_forward.3} parent=1 // pred_check_branch
      %365 = sbr.rel (0) target = $region49
    $region48: #{encoder_forward.3} parent=1 // pred_region
      _
    $region49: #{encoder_forward.3} parent=1 // pred_fallthru
      _
    // Predicated region
    $region50: #{encoder_forward.3} parent=1 // pred_check
      _
    $region51: #{encoder_forward.3} parent=1 // pred_check_branch
      %367 = sbr.rel (0) target = $region53
    $region52: #{encoder_forward.3} parent=1 // pred_region
      %369 = vsyncadd [#allocation5], 0
      %s371 = sshll.u32 [#allocation6], 4
      %s372 = int_to_ptr.vmem [resolvable:$true] %s371
      %s373 = sshll.u32 %s12, 4
      %s374 = int_to_ptr.hbm [resolvable:$true] %s373
      %376 = dma.vmem_to_hbm [thread:$0]  %s372, 32, %s374, [#allocation5]
    $region53: #{encoder_forward.3} parent=1 // pred_fallthru
      _
    // Predicated region
    $region54: #{encoder_forward.3} parent=1 // pred_check
      _
    $region55: #{encoder_forward.3} parent=1 // pred_check_branch
      %378 = sbr.rel (0) target = $region57
    $region56: #{encoder_forward.3} parent=1 // pred_region
      %380 = dma.done [#allocation3], 32
    $region57: #{encoder_forward.3} parent=1 // pred_fallthru
      _
    // Predicated region
    $region58: #{encoder_forward.3} parent=1 // pred_check
      _
    $region59: #{encoder_forward.3} parent=1 // pred_check_branch
      %382 = sbr.rel (0) target = $region61
    $region60: #{encoder_forward.3} parent=1 // pred_region
      %384 = dma.done [#allocation5], 128
    $region61: #{encoder_forward.3} parent=1 // pred_fallthru
      _
    // Predicated region
    $region62: #{encoder_forward.3} parent=1 // pred_check
      _
    $region63: #{encoder_forward.3} parent=1 // pred_check_branch
      %386 = sbr.rel (0) target = $region65
    $region64: #{encoder_forward.3} parent=1 // pred_region
      _
    $region65: #{encoder_forward.3} parent=1 // pred_fallthru
      _
    // Predicated region
    $region66: #{encoder_forward.3} parent=1 // pred_check
      _
    $region67: #{encoder_forward.3} parent=1 // pred_check_branch
      %388 = sbr.rel (0) target = $region69
    $region68: #{encoder_forward.3} parent=1 // pred_region
      %390 = dma.done [#allocation5], 32
    $region69: #{encoder_forward.3} parent=1 // pred_fallthru
      _
    %391 = vsyncpa [#allocation3], 1
    %392 = vsyncpa [#allocation5], 1

// kernel: encoder_forward.2
$region0: #{encoder_forward.2}
  #allocation0 [shape = 'u32[]', space=smem, size = 0x4, offset = 0x4, fixed_abs, tag = 'smem constant byte address 0x4 - core index']
  #allocation1 [shape = 'u32[72,128]{1,0:T(1,128)}', space=vmem, size = 0x9000, scoped, tag = 'internal scratch']
  %s0 = inlined_call_operand.vmem [shape: f32[8,32], index: 0, kind: input, shape index: {}]
  %s1 = inlined_call_operand.vmem [shape: f32[8,3], index: 1, kind: input, shape index: {}]
  %s2 = inlined_call_operand.vmem [shape: f32[24,8], index: 2, kind: input, shape index: {}]
  %s3 = inlined_call_operand.vmem [shape: f32[24,3], index: 3, kind: input, shape index: {}]
  %s4 = inlined_call_operand.vmem [shape: f32[24,8], index: 4, kind: input, shape index: {}]
  %s5 = inlined_call_operand.vmem [shape: f32[24,8], index: 5, kind: input, shape index: {}]
  %s6 = inlined_call_operand.vmem [shape: f32[8,24], index: 6, kind: input, shape index: {}]
  %s7 = inlined_call_operand.vmem [shape: f32[2,1,32], index: 7, kind: input, shape index: {}]
  %s8 = inlined_call_operand.vmem [shape: f32[2,1,32], index: 8, kind: input, shape index: {}]
  %s9 = inlined_call_operand.vmem [shape: bf16[2,32,32], index: 9, kind: input, shape index: {}]
  %s10 = inlined_call_operand.vmem [shape: f32[2,1,32], index: 10, kind: input, shape index: {}]
  %s11 = inlined_call_operand.vmem [shape: bf16[2,96,96], index: 11, kind: input, shape index: {}]
  %s12 = inlined_call_operand.vmem [shape: bf16[2,72,97], index: 12, kind: input, shape index: {}]
  %s13 = inlined_call_operand.vmem [shape: f32[2,1,97], index: 13, kind: input, shape index: {}]
  %s14 = inlined_call_operand.vmem [shape: bf16[2,96,192], index: 14, kind: input, shape index: {}]
  %s15 = inlined_call_operand.vmem [shape: bf16[2,64,32], index: 15, kind: input, shape index: {}]
  %s16 = inlined_call_operand.vmem [shape: f32[2,1,32], index: 16, kind: input, shape index: {}]
  %s17 = inlined_call_operand.vmem [shape: bf16[2,32,64], index: 17, kind: input, shape index: {}]
  %s18 = inlined_call_operand.vmem [shape: f32[2,1,64], index: 18, kind: input, shape index: {}]
  %s19 = inlined_call_operand.vmem [shape: f32[8,32], index: 19, kind: output, shape index: {0}]
  %s20 = inlined_call_operand.vmem [shape: f32[8,96], index: 20, kind: output, shape index: {1}]
  %s21 = inlined_call_operand.vmem [shape: f32[8,3], index: 21, kind: output, shape index: {2}]
  %22 = xla_tuple %s19, %s20, %s21
  %s23 = sld [smem:[#allocation0]]
  $region129: #{encoder_forward.2} parent=0
    _
  %s25 = ssub.s32 1, %s23
  %s26 = scalar_select 0, %s25, %s23
  loop: start=0, step=1, limit=4
  $region2: #{encoder_forward.2} parent=0 // loop_pre_header
    _
  $region3: #{encoder_forward.2} parent=0 // loop_header
    %s28 = sphi 0, %s32
    %p29 = scmp.ge.s32.totalorder %s28, 4
    %s36 = sphi 0, %s36
    %s38 = sphi 0, %s36
    %s39 = sphi 0, %s38
    %s53 = sphi 0, %s39
    %s57 = sphi 0, %s57
    %s59 = sphi 0, %s57
    %s60 = sphi 0, %s59
    %s74 = sphi 0, %s60
    %s78 = sphi 0, %s78
    %s80 = sphi 0, %s78
    %s81 = sphi 0, %s80
    %s95 = sphi 0, %s81
    %s99 = sphi 0, %s99
    %s101 = sphi 0, %s99
    %s102 = sphi 0, %s101
    %s116 = sphi 0, %s102
    %s120 = sphi 0, %s120
    %s122 = sphi 0, %s120
    %s123 = sphi 0, %s122
    %s137 = sphi 0, %s123
    %s141 = sphi 0, %s141
    %s143 = sphi 0, %s141
    %s144 = sphi 0, %s143
    %s158 = sphi 0, %s144
    %s162 = sphi 0, %s162
    %s164 = sphi 0, %s162
    %s165 = sphi 0, %s164
    %s179 = sphi 0, %s165
    %s185 = sphi 0, %s187
    %s188 = sphi 0, %s185
    %s189 = sphi 0, %s188
    %s205 = sphi 0, %s189
    %s211 = sphi 0, %s213
    %s214 = sphi 0, %s211
    %s215 = sphi 0, %s214
    %s231 = sphi 0, %s215
    %s237 = sphi 0, %s239
    %s240 = sphi 0, %s237
    %s241 = sphi 0, %s240
    %s257 = sphi 0, %s241
    %s263 = sphi 0, %s265
    %s266 = sphi 0, %s263
    %s267 = sphi 0, %s266
    %s283 = sphi 0, %s267
    %s289 = sphi 0, %s291
    %s292 = sphi 0, %s289
    %s293 = sphi 0, %s292
    %s309 = sphi 0, %s293
    %s315 = sphi 0, %s317
    %s318 = sphi 0, %s315
    %s319 = sphi 0, %s318
    %s335 = sphi 0, %s319
    %s341 = sphi 0, %s343
    %s344 = sphi 0, %s341
    %s345 = sphi 0, %s344
    %s361 = sphi 0, %s345
    %s367 = sphi 0, %s369
    %s370 = sphi 0, %s367
    %s371 = sphi 0, %s370
    %s387 = sphi 0, %s371
    %s393 = sphi 0, %s395
    %s396 = sphi 0, %s393
    %s397 = sphi 0, %s396
    %s413 = sphi 0, %s397
    %s419 = sphi 0, %s421
    %s422 = sphi 0, %s419
    %s423 = sphi 0, %s422
    %s439 = sphi 0, %s423
    %s445 = sphi 0, %s447
    %s448 = sphi 0, %s445
    %s449 = sphi 0, %s448
    %s465 = sphi 0, %s449
    %s471 = sphi 0, %s473
    %s474 = sphi 0, %s471
    %s475 = sphi 0, %s474
    %s491 = sphi 0, %s475
    %s495 = sphi 0, %s495
    %s497 = sphi 0, %s495
    %s498 = sphi 0, %s497
    %s512 = sphi 0, %s498
    %s516 = sphi 0, %s516
    %s518 = sphi 0, %s516
    %s519 = sphi 0, %s518
    %s533 = sphi 0, %s519
    %s537 = sphi 0, %s537
    %s539 = sphi 0, %s537
    %s540 = sphi 0, %s539
    %s554 = sphi 0, %s540
  $region4: #{encoder_forward.2} parent=0 // loop_header_branch
    %31 = sbr.rel (%p29) target = $region8
  $region5: #{encoder_forward.2} parent=0 // loop_body
    %s33 = ssub.s32 %s28, 1
    %s34 = ssub.s32 %s28, 2
    %s35 = sadd.s32 %s28, 1
    %s37 = sadd.s32 %s36, 1
    %p40 = scmp.eq.s32.totalorder %s28, 1
    %p41 = scmp.ne.s32.totalorder %s36, %s38
    %p42 = scmp.eq.s32.totalorder %s28, 0
    %p43 = por %p41, %p42
    %p44 = scmp.ne.s32.totalorder %s36, %s38
    %p45 = scmp.eq.s32.totalorder %s33, 1
    %p46 = por %p44, %p45
    %p47 = scmp.ne.s32.totalorder %s38, %s39
    %p48 = scmp.eq.s32.totalorder %s33, 0
    %p49 = por %p47, %p48
    %p50 = scmp.ne.s32.totalorder %s38, %s39
    %p51 = scmp.eq.s32.totalorder %s34, 1
    %p52 = por %p50, %p51
    %p54 = scmp.ne.s32.totalorder %s39, %s53
    %p55 = scmp.eq.s32.totalorder %s34, 0
    %p56 = por %p54, %p55
    %s58 = sadd.s32 %s57, 1
    %p61 = scmp.eq.s32.totalorder %s28, 1
    %p62 = scmp.ne.s32.totalorder %s57, %s59
    %p63 = scmp.eq.s32.totalorder %s28, 0
    %p64 = por %p62, %p63
    %p65 = scmp.ne.s32.totalorder %s57, %s59
    %p66 = scmp.eq.s32.totalorder %s33, 1
    %p67 = por %p65, %p66
    %p68 = scmp.ne.s32.totalorder %s59, %s60
    %p69 = scmp.eq.s32.totalorder %s33, 0
    %p70 = por %p68, %p69
    %p71 = scmp.ne.s32.totalorder %s59, %s60
    %p72 = scmp.eq.s32.totalorder %s34, 1
    %p73 = por %p71, %p72
    %p75 = scmp.ne.s32.totalorder %s60, %s74
    %p76 = scmp.eq.s32.totalorder %s34, 0
    %p77 = por %p75, %p76
    %s79 = sadd.s32 %s78, 1
    %p82 = scmp.eq.s32.totalorder %s28, 1
    %p83 = scmp.ne.s32.totalorder %s78, %s80
    %p84 = scmp.eq.s32.totalorder %s28, 0
    %p85 = por %p83, %p84
    %p86 = scmp.ne.s32.totalorder %s78, %s80
    %p87 = scmp.eq.s32.totalorder %s33, 1
    %p88 = por %p86, %p87
    %p89 = scmp.ne.s32.totalorder %s80, %s81
    %p90 = scmp.eq.s32.totalorder %s33, 0
    %p91 = por %p89, %p90
    %p92 = scmp.ne.s32.totalorder %s80, %s81
    %p93 = scmp.eq.s32.totalorder %s34, 1
    %p94 = por %p92, %p93
    %p96 = scmp.ne.s32.totalorder %s81, %s95
    %p97 = scmp.eq.s32.totalorder %s34, 0
    %p98 = por %p96, %p97
    %s100 = sadd.s32 %s99, 1
    %p103 = scmp.eq.s32.totalorder %s28, 1
    %p104 = scmp.ne.s32.totalorder %s99, %s101
    %p105 = scmp.eq.s32.totalorder %s28, 0
    %p106 = por %p104, %p105
    %p107 = scmp.ne.s32.totalorder %s99, %s101
    %p108 = scmp.eq.s32.totalorder %s33, 1
    %p109 = por %p107, %p108
    %p110 = scmp.ne.s32.totalorder %s101, %s102
    %p111 = scmp.eq.s32.totalorder %s33, 0
    %p112 = por %p110, %p111
    %p113 = scmp.ne.s32.totalorder %s101, %s102
    %p114 = scmp.eq.s32.totalorder %s34, 1
    %p115 = por %p113, %p114
    %p117 = scmp.ne.s32.totalorder %s102, %s116
    %p118 = scmp.eq.s32.totalorder %s34, 0
    %p119 = por %p117, %p118
    %s121 = sadd.s32 %s120, 1
    %p124 = scmp.eq.s32.totalorder %s28, 1
    %p125 = scmp.ne.s32.totalorder %s120, %s122
    %p126 = scmp.eq.s32.totalorder %s28, 0
    %p127 = por %p125, %p126
    %p128 = scmp.ne.s32.totalorder %s120, %s122
    %p129 = scmp.eq.s32.totalorder %s33, 1
    %p130 = por %p128, %p129
    %p131 = scmp.ne.s32.totalorder %s122, %s123
    %p132 = scmp.eq.s32.totalorder %s33, 0
    %p133 = por %p131, %p132
    %p134 = scmp.ne.s32.totalorder %s122, %s123
    %p135 = scmp.eq.s32.totalorder %s34, 1
    %p136 = por %p134, %p135
    %p138 = scmp.ne.s32.totalorder %s123, %s137
    %p139 = scmp.eq.s32.totalorder %s34, 0
    %p140 = por %p138, %p139
    %s142 = sadd.s32 %s141, 1
    %p145 = scmp.eq.s32.totalorder %s28, 1
    %p146 = scmp.ne.s32.totalorder %s141, %s143
    %p147 = scmp.eq.s32.totalorder %s28, 0
    %p148 = por %p146, %p147
    %p149 = scmp.ne.s32.totalorder %s141, %s143
    %p150 = scmp.eq.s32.totalorder %s33, 1
    %p151 = por %p149, %p150
    %p152 = scmp.ne.s32.totalorder %s143, %s144
    %p153 = scmp.eq.s32.totalorder %s33, 0
    %p154 = por %p152, %p153
    %p155 = scmp.ne.s32.totalorder %s143, %s144
    %p156 = scmp.eq.s32.totalorder %s34, 1
    %p157 = por %p155, %p156
    %p159 = scmp.ne.s32.totalorder %s144, %s158
    %p160 = scmp.eq.s32.totalorder %s34, 0
    %p161 = por %p159, %p160
    %s163 = sadd.s32 %s162, 1
    %p166 = scmp.eq.s32.totalorder %s28, 1
    %p167 = scmp.ne.s32.totalorder %s162, %s164
    %p168 = scmp.eq.s32.totalorder %s28, 0
    %p169 = por %p167, %p168
    %p170 = scmp.ne.s32.totalorder %s162, %s164
    %p171 = scmp.eq.s32.totalorder %s33, 1
    %p172 = por %p170, %p171
    %p173 = scmp.ne.s32.totalorder %s164, %s165
    %p174 = scmp.eq.s32.totalorder %s33, 0
    %p175 = por %p173, %p174
    %p176 = scmp.ne.s32.totalorder %s164, %s165
    %p177 = scmp.eq.s32.totalorder %s34, 1
    %p178 = por %p176, %p177
    %p180 = scmp.ne.s32.totalorder %s165, %s179
    %p181 = scmp.eq.s32.totalorder %s34, 0
    %p182 = por %p180, %p181
    %s183 = ssub.s32 %s28, %s35
    %p184 = scmp.eq.s32.totalorder %s183, 0
    %s186 = sadd.s32 %s185, 1
    %s187 = scalar_select %p184, %s185, %s186
    %p190 = pneg %p184
    %p191 = scmp.eq.s32.totalorder %s28, 1
    %p192 = por %p190, %p191
    %p193 = scmp.ne.s32.totalorder %s185, %s188
    %p194 = scmp.eq.s32.totalorder %s28, 0
    %p195 = por %p193, %p194
    %p196 = scmp.ne.s32.totalorder %s185, %s188
    %p197 = scmp.eq.s32.totalorder %s33, 1
    %p198 = por %p196, %p197
    %p199 = scmp.ne.s32.totalorder %s188, %s189
    %p200 = scmp.eq.s32.totalorder %s33, 0
    %p201 = por %p199, %p200
    %p202 = scmp.ne.s32.totalorder %s188, %s189
    %p203 = scmp.eq.s32.totalorder %s34, 1
    %p204 = por %p202, %p203
    %p206 = scmp.ne.s32.totalorder %s189, %s205
    %p207 = scmp.eq.s32.totalorder %s34, 0
    %p208 = por %p206, %p207
    %s209 = ssub.s32 %s28, %s35
    %p210 = scmp.eq.s32.totalorder %s209, 0
    %s212 = sadd.s32 %s211, 1
    %s213 = scalar_select %p210, %s211, %s212
    %p216 = pneg %p210
    %p217 = scmp.eq.s32.totalorder %s28, 1
    %p218 = por %p216, %p217
    %p219 = scmp.ne.s32.totalorder %s211, %s214
    %p220 = scmp.eq.s32.totalorder %s28, 0
    %p221 = por %p219, %p220
    %p222 = scmp.ne.s32.totalorder %s211, %s214
    %p223 = scmp.eq.s32.totalorder %s33, 1
    %p224 = por %p222, %p223
    %p225 = scmp.ne.s32.totalorder %s214, %s215
    %p226 = scmp.eq.s32.totalorder %s33, 0
    %p227 = por %p225, %p226
    %p228 = scmp.ne.s32.totalorder %s214, %s215
    %p229 = scmp.eq.s32.totalorder %s34, 1
    %p230 = por %p228, %p229
    %p232 = scmp.ne.s32.totalorder %s215, %s231
    %p233 = scmp.eq.s32.totalorder %s34, 0
    %p234 = por %p232, %p233
    %s235 = ssub.s32 %s28, %s35
    %p236 = scmp.eq.s32.totalorder %s235, 0
    %s238 = sadd.s32 %s237, 1
    %s239 = scalar_select %p236, %s237, %s238
    %p242 = pneg %p236
    %p243 = scmp.eq.s32.totalorder %s28, 1
    %p244 = por %p242, %p243
    %p245 = scmp.ne.s32.totalorder %s237, %s240
    %p246 = scmp.eq.s32.totalorder %s28, 0
    %p247 = por %p245, %p246
    %p248 = scmp.ne.s32.totalorder %s237, %s240
    %p249 = scmp.eq.s32.totalorder %s33, 1
    %p250 = por %p248, %p249
    %p251 = scmp.ne.s32.totalorder %s240, %s241
    %p252 = scmp.eq.s32.totalorder %s33, 0
    %p253 = por %p251, %p252
    %p254 = scmp.ne.s32.totalorder %s240, %s241
    %p255 = scmp.eq.s32.totalorder %s34, 1
    %p256 = por %p254, %p255
    %p258 = scmp.ne.s32.totalorder %s241, %s257
    %p259 = scmp.eq.s32.totalorder %s34, 0
    %p260 = por %p258, %p259
    %s261 = ssub.s32 %s28, %s35
    %p262 = scmp.eq.s32.totalorder %s261, 0
    %s264 = sadd.s32 %s263, 1
    %s265 = scalar_select %p262, %s263, %s264
    %p268 = pneg %p262
    %p269 = scmp.eq.s32.totalorder %s28, 1
    %p270 = por %p268, %p269
    %p271 = scmp.ne.s32.totalorder %s263, %s266
    %p272 = scmp.eq.s32.totalorder %s28, 0
    %p273 = por %p271, %p272
    %p274 = scmp.ne.s32.totalorder %s263, %s266
    %p275 = scmp.eq.s32.totalorder %s33, 1
    %p276 = por %p274, %p275
    %p277 = scmp.ne.s32.totalorder %s266, %s267
    %p278 = scmp.eq.s32.totalorder %s33, 0
    %p279 = por %p277, %p278
    %p280 = scmp.ne.s32.totalorder %s266, %s267
    %p281 = scmp.eq.s32.totalorder %s34, 1
    %p282 = por %p280, %p281
    %p284 = scmp.ne.s32.totalorder %s267, %s283
    %p285 = scmp.eq.s32.totalorder %s34, 0
    %p286 = por %p284, %p285
    %s287 = ssub.s32 %s28, %s35
    %p288 = scmp.eq.s32.totalorder %s287, 0
    %s290 = sadd.s32 %s289, 1
    %s291 = scalar_select %p288, %s289, %s290
    %p294 = pneg %p288
    %p295 = scmp.eq.s32.totalorder %s28, 1
    %p296 = por %p294, %p295
    %p297 = scmp.ne.s32.totalorder %s289, %s292
    %p298 = scmp.eq.s32.totalorder %s28, 0
    %p299 = por %p297, %p298
    %p300 = scmp.ne.s32.totalorder %s289, %s292
    %p301 = scmp.eq.s32.totalorder %s33, 1
    %p302 = por %p300, %p301
    %p303 = scmp.ne.s32.totalorder %s292, %s293
    %p304 = scmp.eq.s32.totalorder %s33, 0
    %p305 = por %p303, %p304
    %p306 = scmp.ne.s32.totalorder %s292, %s293
    %p307 = scmp.eq.s32.totalorder %s34, 1
    %p308 = por %p306, %p307
    %p310 = scmp.ne.s32.totalorder %s293, %s309
    %p311 = scmp.eq.s32.totalorder %s34, 0
    %p312 = por %p310, %p311
    %s313 = ssub.s32 %s28, %s35
    %p314 = scmp.eq.s32.totalorder %s313, 0
    %s316 = sadd.s32 %s315, 1
    %s317 = scalar_select %p314, %s315, %s316
    %p320 = pneg %p314
    %p321 = scmp.eq.s32.totalorder %s28, 1
    %p322 = por %p320, %p321
    %p323 = scmp.ne.s32.totalorder %s315, %s318
    %p324 = scmp.eq.s32.totalorder %s28, 0
    %p325 = por %p323, %p324
    %p326 = scmp.ne.s32.totalorder %s315, %s318
    %p327 = scmp.eq.s32.totalorder %s33, 1
    %p328 = por %p326, %p327
    %p329 = scmp.ne.s32.totalorder %s318, %s319
    %p330 = scmp.eq.s32.totalorder %s33, 0
    %p331 = por %p329, %p330
    %p332 = scmp.ne.s32.totalorder %s318, %s319
    %p333 = scmp.eq.s32.totalorder %s34, 1
    %p334 = por %p332, %p333
    %p336 = scmp.ne.s32.totalorder %s319, %s335
    %p337 = scmp.eq.s32.totalorder %s34, 0
    %p338 = por %p336, %p337
    %s339 = ssub.s32 %s28, %s35
    %p340 = scmp.eq.s32.totalorder %s339, 0
    %s342 = sadd.s32 %s341, 1
    %s343 = scalar_select %p340, %s341, %s342
    %p346 = pneg %p340
    %p347 = scmp.eq.s32.totalorder %s28, 1
    %p348 = por %p346, %p347
    %p349 = scmp.ne.s32.totalorder %s341, %s344
    %p350 = scmp.eq.s32.totalorder %s28, 0
    %p351 = por %p349, %p350
    %p352 = scmp.ne.s32.totalorder %s341, %s344
    %p353 = scmp.eq.s32.totalorder %s33, 1
    %p354 = por %p352, %p353
    %p355 = scmp.ne.s32.totalorder %s344, %s345
    %p356 = scmp.eq.s32.totalorder %s33, 0
    %p357 = por %p355, %p356
    %p358 = scmp.ne.s32.totalorder %s344, %s345
    %p359 = scmp.eq.s32.totalorder %s34, 1
    %p360 = por %p358, %p359
    %p362 = scmp.ne.s32.totalorder %s345, %s361
    %p363 = scmp.eq.s32.totalorder %s34, 0
    %p364 = por %p362, %p363
    %s365 = ssub.s32 %s28, %s35
    %p366 = scmp.eq.s32.totalorder %s365, 0
    %s368 = sadd.s32 %s367, 1
    %s369 = scalar_select %p366, %s367, %s368
    %p372 = pneg %p366
    %p373 = scmp.eq.s32.totalorder %s28, 1
    %p374 = por %p372, %p373
    %p375 = scmp.ne.s32.totalorder %s367, %s370
    %p376 = scmp.eq.s32.totalorder %s28, 0
    %p377 = por %p375, %p376
    %p378 = scmp.ne.s32.totalorder %s367, %s370
    %p379 = scmp.eq.s32.totalorder %s33, 1
    %p380 = por %p378, %p379
    %p381 = scmp.ne.s32.totalorder %s370, %s371
    %p382 = scmp.eq.s32.totalorder %s33, 0
    %p383 = por %p381, %p382
    %p384 = scmp.ne.s32.totalorder %s370, %s371
    %p385 = scmp.eq.s32.totalorder %s34, 1
    %p386 = por %p384, %p385
    %p388 = scmp.ne.s32.totalorder %s371, %s387
    %p389 = scmp.eq.s32.totalorder %s34, 0
    %p390 = por %p388, %p389
    %s391 = ssub.s32 %s28, %s35
    %p392 = scmp.eq.s32.totalorder %s391, 0
    %s394 = sadd.s32 %s393, 1
    %s395 = scalar_select %p392, %s393, %s394
    %p398 = pneg %p392
    %p399 = scmp.eq.s32.totalorder %s28, 1
    %p400 = por %p398, %p399
    %p401 = scmp.ne.s32.totalorder %s393, %s396
    %p402 = scmp.eq.s32.totalorder %s28, 0
    %p403 = por %p401, %p402
    %p404 = scmp.ne.s32.totalorder %s393, %s396
    %p405 = scmp.eq.s32.totalorder %s33, 1
    %p406 = por %p404, %p405
    %p407 = scmp.ne.s32.totalorder %s396, %s397
    %p408 = scmp.eq.s32.totalorder %s33, 0
    %p409 = por %p407, %p408
    %p410 = scmp.ne.s32.totalorder %s396, %s397
    %p411 = scmp.eq.s32.totalorder %s34, 1
    %p412 = por %p410, %p411
    %p414 = scmp.ne.s32.totalorder %s397, %s413
    %p415 = scmp.eq.s32.totalorder %s34, 0
    %p416 = por %p414, %p415
    %s417 = ssub.s32 %s28, %s35
    %p418 = scmp.eq.s32.totalorder %s417, 0
    %s420 = sadd.s32 %s419, 1
    %s421 = scalar_select %p418, %s419, %s420
    %p424 = pneg %p418
    %p425 = scmp.eq.s32.totalorder %s28, 1
    %p426 = por %p424, %p425
    %p427 = scmp.ne.s32.totalorder %s419, %s422
    %p428 = scmp.eq.s32.totalorder %s28, 0
    %p429 = por %p427, %p428
    %p430 = scmp.ne.s32.totalorder %s419, %s422
    %p431 = scmp.eq.s32.totalorder %s33, 1
    %p432 = por %p430, %p431
    %p433 = scmp.ne.s32.totalorder %s422, %s423
    %p434 = scmp.eq.s32.totalorder %s33, 0
    %p435 = por %p433, %p434
    %p436 = scmp.ne.s32.totalorder %s422, %s423
    %p437 = scmp.eq.s32.totalorder %s34, 1
    %p438 = por %p436, %p437
    %p440 = scmp.ne.s32.totalorder %s423, %s439
    %p441 = scmp.eq.s32.totalorder %s34, 0
    %p442 = por %p440, %p441
    %s443 = ssub.s32 %s28, %s35
    %p444 = scmp.eq.s32.totalorder %s443, 0
    %s446 = sadd.s32 %s445, 1
    %s447 = scalar_select %p444, %s445, %s446
    %p450 = pneg %p444
    %p451 = scmp.eq.s32.totalorder %s28, 1
    %p452 = por %p450, %p451
    %p453 = scmp.ne.s32.totalorder %s445, %s448
    %p454 = scmp.eq.s32.totalorder %s28, 0
    %p455 = por %p453, %p454
    %p456 = scmp.ne.s32.totalorder %s445, %s448
    %p457 = scmp.eq.s32.totalorder %s33, 1
    %p458 = por %p456, %p457
    %p459 = scmp.ne.s32.totalorder %s448, %s449
    %p460 = scmp.eq.s32.totalorder %s33, 0
    %p461 = por %p459, %p460
    %p462 = scmp.ne.s32.totalorder %s448, %s449
    %p463 = scmp.eq.s32.totalorder %s34, 1
    %p464 = por %p462, %p463
    %p466 = scmp.ne.s32.totalorder %s449, %s465
    %p467 = scmp.eq.s32.totalorder %s34, 0
    %p468 = por %p466, %p467
    %s469 = ssub.s32 %s28, %s35
    %p470 = scmp.eq.s32.totalorder %s469, 0
    %s472 = sadd.s32 %s471, 1
    %s473 = scalar_select %p470, %s471, %s472
    %p476 = pneg %p470
    %p477 = scmp.eq.s32.totalorder %s28, 1
    %p478 = por %p476, %p477
    %p479 = scmp.ne.s32.totalorder %s471, %s474
    %p480 = scmp.eq.s32.totalorder %s28, 0
    %p481 = por %p479, %p480
    %p482 = scmp.ne.s32.totalorder %s471, %s474
    %p483 = scmp.eq.s32.totalorder %s33, 1
    %p484 = por %p482, %p483
    %p485 = scmp.ne.s32.totalorder %s474, %s475
    %p486 = scmp.eq.s32.totalorder %s33, 0
    %p487 = por %p485, %p486
    %p488 = scmp.ne.s32.totalorder %s474, %s475
    %p489 = scmp.eq.s32.totalorder %s34, 1
    %p490 = por %p488, %p489
    %p492 = scmp.ne.s32.totalorder %s475, %s491
    %p493 = scmp.eq.s32.totalorder %s34, 0
    %p494 = por %p492, %p493
    %s496 = sadd.s32 %s495, 1
    %p499 = scmp.eq.s32.totalorder %s28, 1
    %p500 = scmp.ne.s32.totalorder %s495, %s497
    %p501 = scmp.eq.s32.totalorder %s28, 0
    %p502 = por %p500, %p501
    %p503 = scmp.ne.s32.totalorder %s495, %s497
    %p504 = scmp.eq.s32.totalorder %s33, 1
    %p505 = por %p503, %p504
    %p506 = scmp.ne.s32.totalorder %s497, %s498
    %p507 = scmp.eq.s32.totalorder %s33, 0
    %p508 = por %p506, %p507
    %p509 = scmp.ne.s32.totalorder %s497, %s498
    %p510 = scmp.eq.s32.totalorder %s34, 1
    %p511 = por %p509, %p510
    %p513 = scmp.ne.s32.totalorder %s498, %s512
    %p514 = scmp.eq.s32.totalorder %s34, 0
    %p515 = por %p513, %p514
    %s517 = sadd.s32 %s516, 1
    %p520 = scmp.eq.s32.totalorder %s28, 1
    %p521 = scmp.ne.s32.totalorder %s516, %s518
    %p522 = scmp.eq.s32.totalorder %s28, 0
    %p523 = por %p521, %p522
    %p524 = scmp.ne.s32.totalorder %s516, %s518
    %p525 = scmp.eq.s32.totalorder %s33, 1
    %p526 = por %p524, %p525
    %p527 = scmp.ne.s32.totalorder %s518, %s519
    %p528 = scmp.eq.s32.totalorder %s33, 0
    %p529 = por %p527, %p528
    %p530 = scmp.ne.s32.totalorder %s518, %s519
    %p531 = scmp.eq.s32.totalorder %s34, 1
    %p532 = por %p530, %p531
    %p534 = scmp.ne.s32.totalorder %s519, %s533
    %p535 = scmp.eq.s32.totalorder %s34, 0
    %p536 = por %p534, %p535
    %s538 = sadd.s32 %s537, 1
    %p541 = scmp.eq.s32.totalorder %s28, 1
    %p542 = scmp.ne.s32.totalorder %s537, %s539
    %p543 = scmp.eq.s32.totalorder %s28, 0
    %p544 = por %p542, %p543
    %p545 = scmp.ne.s32.totalorder %s537, %s539
    %p546 = scmp.eq.s32.totalorder %s33, 1
    %p547 = por %p545, %p546
    %p548 = scmp.ne.s32.totalorder %s539, %s540
    %p549 = scmp.eq.s32.totalorder %s33, 0
    %p550 = por %p548, %p549
    %p551 = scmp.ne.s32.totalorder %s539, %s540
    %p552 = scmp.eq.s32.totalorder %s34, 1
    %p553 = por %p551, %p552
    %p555 = scmp.ne.s32.totalorder %s540, %s554
    %p556 = scmp.eq.s32.totalorder %s34, 0
    %p557 = por %p555, %p556
    %p558 = scmp.le.s32.totalorder 1, %s28
    %p559 = scmp.lt.s32.totalorder %s28, 3
    %p560 = pnand %p558, %p559
    %p561 = pneg %p560
    // Predicated region
    $region9: #{encoder_forward.2} parent=5 // pred_check
      _
    $region10: #{encoder_forward.2} parent=5 // pred_check_branch
      %563 = sbr.rel (%p560) target = $region12
    $region11: #{encoder_forward.2} parent=5 // pred_region
      %s564 = ssub.s32 %s28, 1
      // Predicated region
      $region13: #{encoder_forward.2} parent=11 // pred_check
        %p565 = pneg %p49
      $region14: #{encoder_forward.2} parent=11 // pred_check_branch
        %567 = sbr.rel (%p565) target = $region16
      $region15: #{encoder_forward.2} parent=11 // pred_region
        _
      $region16: #{encoder_forward.2} parent=11 // pred_fallthru
        _
      // Predicated region
      $region17: #{encoder_forward.2} parent=11 // pred_check
        %p568 = pneg %p70
      $region18: #{encoder_forward.2} parent=11 // pred_check_branch
        %570 = sbr.rel (%p568) target = $region20
      $region19: #{encoder_forward.2} parent=11 // pred_region
        _
      $region20: #{encoder_forward.2} parent=11 // pred_fallthru
        _
      // Predicated region
      $region21: #{encoder_forward.2} parent=11 // pred_check
        %p571 = pneg %p91
      $region22: #{encoder_forward.2} parent=11 // pred_check_branch
        %573 = sbr.rel (%p571) target = $region24
      $region23: #{encoder_forward.2} parent=11 // pred_region
        _
      $region24: #{encoder_forward.2} parent=11 // pred_fallthru
        _
      // Predicated region
      $region25: #{encoder_forward.2} parent=11 // pred_check
        %p574 = pneg %p112
      $region26: #{encoder_forward.2} parent=11 // pred_check_branch
        %576 = sbr.rel (%p574) target = $region28
      $region27: #{encoder_forward.2} parent=11 // pred_region
        _
      $region28: #{encoder_forward.2} parent=11 // pred_fallthru
        _
      // Predicated region
      $region29: #{encoder_forward.2} parent=11 // pred_check
        %p577 = pneg %p133
      $region30: #{encoder_forward.2} parent=11 // pred_check_branch
        %579 = sbr.rel (%p577) target = $region32
      $region31: #{encoder_forward.2} parent=11 // pred_region
        _
      $region32: #{encoder_forward.2} parent=11 // pred_fallthru
        _
      // Predicated region
      $region33: #{encoder_forward.2} parent=11 // pred_check
        %p580 = pneg %p154
      $region34: #{encoder_forward.2} parent=11 // pred_check_branch
        %582 = sbr.rel (%p580) target = $region36
      $region35: #{encoder_forward.2} parent=11 // pred_region
        _
      $region36: #{encoder_forward.2} parent=11 // pred_fallthru
        _
      // Predicated region
      $region37: #{encoder_forward.2} parent=11 // pred_check
        %p583 = pneg %p175
      $region38: #{encoder_forward.2} parent=11 // pred_check_branch
        %585 = sbr.rel (%p583) target = $region40
      $region39: #{encoder_forward.2} parent=11 // pred_region
        _
      $region40: #{encoder_forward.2} parent=11 // pred_fallthru
        _
    $region12: #{encoder_forward.2} parent=5 // pred_fallthru
      _
    %p586 = scmp.lt.s32.totalorder %s28, 2
    // Predicated region
    $region41: #{encoder_forward.2} parent=5 // pred_check
      %p587 = pneg %p586
    $region42: #{encoder_forward.2} parent=5 // pred_check_branch
      %589 = sbr.rel (%p587) target = $region44
    $region43: #{encoder_forward.2} parent=5 // pred_region
      // Predicated region
      $region45: #{encoder_forward.2} parent=43 // pred_check
        %p590 = pneg %p195
      $region46: #{encoder_forward.2} parent=43 // pred_check_branch
        %592 = sbr.rel (%p590) target = $region48
      $region47: #{encoder_forward.2} parent=43 // pred_region
        %p593 = scmp.lt.s32.totalorder %s28, 1
        %s594 = scalar_select %p593, %s28, 1
        %s595 = scalar_lea.vmem %s7, %s594
      $region48: #{encoder_forward.2} parent=43 // pred_fallthru
        _
      // Predicated region
      $region49: #{encoder_forward.2} parent=43 // pred_check
        %p596 = pneg %p221
      $region50: #{encoder_forward.2} parent=43 // pred_check_branch
        %598 = sbr.rel (%p596) target = $region52
      $region51: #{encoder_forward.2} parent=43 // pred_region
        %p599 = scmp.lt.s32.totalorder %s28, 1
        %s600 = scalar_select %p599, %s28, 1
        %s601 = scalar_lea.vmem %s8, %s600
      $region52: #{encoder_forward.2} parent=43 // pred_fallthru
        _
      // Predicated region
      $region53: #{encoder_forward.2} parent=43 // pred_check
        %p602 = pneg %p247
      $region54: #{encoder_forward.2} parent=43 // pred_check_branch
        %604 = sbr.rel (%p602) target = $region56
      $region55: #{encoder_forward.2} parent=43 // pred_region
        %p605 = scmp.lt.s32.totalorder %s28, 1
        %s606 = scalar_select %p605, %s28, 1
        %s607 = smul.addr %s606, 4
        %s608 = smul.addr %s607, 4
        %s609 = scalar_lea.vmem %s9, %s608
      $region56: #{encoder_forward.2} parent=43 // pred_fallthru
        _
      // Predicated region
      $region57: #{encoder_forward.2} parent=43 // pred_check
        %p610 = pneg %p273
      $region58: #{encoder_forward.2} parent=43 // pred_check_branch
        %612 = sbr.rel (%p610) target = $region60
      $region59: #{encoder_forward.2} parent=43 // pred_region
        %p613 = scmp.lt.s32.totalorder %s28, 1
        %s614 = scalar_select %p613, %s28, 1
        %s615 = scalar_lea.vmem %s10, %s614
      $region60: #{encoder_forward.2} parent=43 // pred_fallthru
        _
      // Predicated region
      $region61: #{encoder_forward.2} parent=43 // pred_check
        %p616 = pneg %p299
      $region62: #{encoder_forward.2} parent=43 // pred_check_branch
        %618 = sbr.rel (%p616) target = $region64
      $region63: #{encoder_forward.2} parent=43 // pred_region
        %p619 = scmp.lt.s32.totalorder %s28, 1
        %s620 = scalar_select %p619, %s28, 1
        %s621 = smul.addr %s620, 12
        %s622 = smul.addr %s621, 4
        %s623 = scalar_lea.vmem %s11, %s622
      $region64: #{encoder_forward.2} parent=43 // pred_fallthru
        _
      // Predicated region
      $region65: #{encoder_forward.2} parent=43 // pred_check
        %p624 = pneg %p325
      $region66: #{encoder_forward.2} parent=43 // pred_check_branch
        %626 = sbr.rel (%p624) target = $region68
      $region67: #{encoder_forward.2} parent=43 // pred_region
        %p627 = scmp.lt.s32.totalorder %s28, 1
        %s628 = scalar_select %p627, %s28, 1
        %s629 = smul.addr %s628, 9
        %s630 = smul.addr %s629, 4
        %s631 = scalar_lea.vmem %s12, %s630
      $region68: #{encoder_forward.2} parent=43 // pred_fallthru
        _
      // Predicated region
      $region69: #{encoder_forward.2} parent=43 // pred_check
        %p632 = pneg %p351
      $region70: #{encoder_forward.2} parent=43 // pred_check_branch
        %634 = sbr.rel (%p632) target = $region72
      $region71: #{encoder_forward.2} parent=43 // pred_region
        %p635 = scmp.lt.s32.totalorder %s28, 1
        %s636 = scalar_select %p635, %s28, 1
        %s637 = scalar_lea.vmem %s13, %s636
      $region72: #{encoder_forward.2} parent=43 // pred_fallthru
        _
      // Predicated region
      $region73: #{encoder_forward.2} parent=43 // pred_check
        %p638 = pneg %p377
      $region74: #{encoder_forward.2} parent=43 // pred_check_branch
        %640 = sbr.rel (%p638) target = $region76
      $region75: #{encoder_forward.2} parent=43 // pred_region
        %p641 = scmp.lt.s32.totalorder %s28, 1
        %s642 = scalar_select %p641, %s28, 1
        %s643 = smul.addr %s642, 24
        %s644 = smul.addr %s643, 4
        %s645 = scalar_lea.vmem %s14, %s644
      $region76: #{encoder_forward.2} parent=43 // pred_fallthru
        _
      // Predicated region
      $region77: #{encoder_forward.2} parent=43 // pred_check
        %p646 = pneg %p403
      $region78: #{encoder_forward.2} parent=43 // pred_check_branch
        %648 = sbr.rel (%p646) target = $region80
      $region79: #{encoder_forward.2} parent=43 // pred_region
        %p649 = scmp.lt.s32.totalorder %s28, 1
        %s650 = scalar_select %p649, %s28, 1
        %s651 = smul.addr %s650, 8
        %s652 = smul.addr %s651, 4
        %s653 = scalar_lea.vmem %s15, %s652
      $region80: #{encoder_forward.2} parent=43 // pred_fallthru
        _
      // Predicated region
      $region81: #{encoder_forward.2} parent=43 // pred_check
        %p654 = pneg %p429
      $region82: #{encoder_forward.2} parent=43 // pred_check_branch
        %656 = sbr.rel (%p654) target = $region84
      $region83: #{encoder_forward.2} parent=43 // pred_region
        %p657 = scmp.lt.s32.totalorder %s28, 1
        %s658 = scalar_select %p657, %s28, 1
        %s659 = scalar_lea.vmem %s16, %s658
      $region84: #{encoder_forward.2} parent=43 // pred_fallthru
        _
      // Predicated region
      $region85: #{encoder_forward.2} parent=43 // pred_check
        %p660 = pneg %p455
      $region86: #{encoder_forward.2} parent=43 // pred_check_branch
        %662 = sbr.rel (%p660) target = $region88
      $region87: #{encoder_forward.2} parent=43 // pred_region
        %p663 = scmp.lt.s32.totalorder %s28, 1
        %s664 = scalar_select %p663, %s28, 1
        %s665 = smul.addr %s664, 4
        %s666 = smul.addr %s665, 4
        %s667 = scalar_lea.vmem %s17, %s666
      $region88: #{encoder_forward.2} parent=43 // pred_fallthru
        _
      // Predicated region
      $region89: #{encoder_forward.2} parent=43 // pred_check
        %p668 = pneg %p481
      $region90: #{encoder_forward.2} parent=43 // pred_check_branch
        %670 = sbr.rel (%p668) target = $region92
      $region91: #{encoder_forward.2} parent=43 // pred_region
        %p671 = scmp.lt.s32.totalorder %s28, 1
        %s672 = scalar_select %p671, %s28, 1
        %s673 = scalar_lea.vmem %s18, %s672
      $region92: #{encoder_forward.2} parent=43 // pred_fallthru
        _
    $region44: #{encoder_forward.2} parent=5 // pred_fallthru
      _
    %p674 = scmp.le.s32.totalorder 1, %s28
    %p675 = scmp.lt.s32.totalorder %s28, 3
    %p676 = pnand %p674, %p675
    %p677 = pneg %p676
    // Predicated region
    $region93: #{encoder_forward.2} parent=5 // pred_check
      _
    $region94: #{encoder_forward.2} parent=5 // pred_check_branch
      %679 = sbr.rel (%p676) target = $region96
    $region95: #{encoder_forward.2} parent=5 // pred_region
      %s680 = ssub.s32 %s28, 1
      %p681 = pneg %p49
      %p682 = pneg %p46
      %p683 = pneg %p70
      %p684 = pneg %p67
      %p685 = pneg %p91
      %p686 = pneg %p88
      %p687 = pneg %p112
      %p688 = pneg %p109
      %p689 = pneg %p133
      %p690 = pneg %p130
      %p691 = pneg %p154
      %p692 = pneg %p151
      %p693 = pneg %p175
      %p694 = pneg %p172
      %p695 = scmp.lt.s32.totalorder %s33, 1
      %s696 = scalar_select %p695, %s33, 1
      %s697 = scalar_lea.vmem %s7, %s696
      %p698 = pneg %p201
      %p699 = pneg %p198
      %p700 = scmp.lt.s32.totalorder %s33, 1
      %s701 = scalar_select %p700, %s33, 1
      %s702 = scalar_lea.vmem %s8, %s701
      %p703 = pneg %p227
      %p704 = pneg %p224
      %p705 = scmp.lt.s32.totalorder %s33, 1
      %s706 = scalar_select %p705, %s33, 1
      %s707 = smul.addr %s706, 4
      %s708 = smul.addr %s707, 4
      %s709 = scalar_lea.vmem %s9, %s708
      %p710 = pneg %p253
      %p711 = pneg %p250
      %p712 = scmp.lt.s32.totalorder %s33, 1
      %s713 = scalar_select %p712, %s33, 1
      %s714 = scalar_lea.vmem %s10, %s713
      %p715 = pneg %p279
      %p716 = pneg %p276
      %p717 = scmp.lt.s32.totalorder %s33, 1
      %s718 = scalar_select %p717, %s33, 1
      %s719 = smul.addr %s718, 12
      %s720 = smul.addr %s719, 4
      %s721 = scalar_lea.vmem %s11, %s720
      %p722 = pneg %p305
      %p723 = pneg %p302
      %p724 = scmp.lt.s32.totalorder %s33, 1
      %s725 = scalar_select %p724, %s33, 1
      %s726 = smul.addr %s725, 9
      %s727 = smul.addr %s726, 4
      %s728 = scalar_lea.vmem %s12, %s727
      %p729 = pneg %p331
      %p730 = pneg %p328
      %p731 = scmp.lt.s32.totalorder %s33, 1
      %s732 = scalar_select %p731, %s33, 1
      %s733 = scalar_lea.vmem %s13, %s732
      %p734 = pneg %p357
      %p735 = pneg %p354
      %p736 = scmp.lt.s32.totalorder %s33, 1
      %s737 = scalar_select %p736, %s33, 1
      %s738 = smul.addr %s737, 24
      %s739 = smul.addr %s738, 4
      %s740 = scalar_lea.vmem %s14, %s739
      %p741 = pneg %p383
      %p742 = pneg %p380
      %p743 = scmp.lt.s32.totalorder %s33, 1
      %s744 = scalar_select %p743, %s33, 1
      %s745 = smul.addr %s744, 8
      %s746 = smul.addr %s745, 4
      %s747 = scalar_lea.vmem %s15, %s746
      %p748 = pneg %p409
      %p749 = pneg %p406
      %p750 = scmp.lt.s32.totalorder %s33, 1
      %s751 = scalar_select %p750, %s33, 1
      %s752 = scalar_lea.vmem %s16, %s751
      %p753 = pneg %p435
      %p754 = pneg %p432
      %p755 = scmp.lt.s32.totalorder %s33, 1
      %s756 = scalar_select %p755, %s33, 1
      %s757 = smul.addr %s756, 4
      %s758 = smul.addr %s757, 4
      %s759 = scalar_lea.vmem %s17, %s758
      %p760 = pneg %p461
      %p761 = pneg %p458
      %p762 = scmp.lt.s32.totalorder %s33, 1
      %s763 = scalar_select %p762, %s33, 1
      %s764 = scalar_lea.vmem %s18, %s763
      %p765 = pneg %p487
      %p766 = pneg %p484
      %p767 = pneg %p508
      %p768 = pneg %p505
      %p769 = pneg %p529
      %p770 = pneg %p526
      %p771 = pneg %p550
      %p772 = pneg %p547
      %p773 = scmp.lt.s32.totalorder %s33, 1
      %s774 = scalar_select %p773, %s33, 1
      %s775 = scalar_lea.vmem %s7, %s774
      %p776 = scmp.lt.s32.totalorder %s33, 1
      %s777 = scalar_select %p776, %s33, 1
      %s778 = scalar_lea.vmem %s8, %s777
      %p779 = scmp.lt.s32.totalorder %s33, 1
      %s780 = scalar_select %p779, %s33, 1
      %s781 = smul.addr %s780, 4
      %s782 = smul.addr %s781, 4
      %s783 = scalar_lea.vmem %s9, %s782
      %p784 = scmp.lt.s32.totalorder %s33, 1
      %s785 = scalar_select %p784, %s33, 1
      %s786 = scalar_lea.vmem %s10, %s785
      %p787 = scmp.lt.s32.totalorder %s33, 1
      %s788 = scalar_select %p787, %s33, 1
      %s789 = smul.addr %s788, 12
      %s790 = smul.addr %s789, 4
      %s791 = scalar_lea.vmem %s11, %s790
      %p792 = scmp.lt.s32.totalorder %s33, 1
      %s793 = scalar_select %p792, %s33, 1
      %s794 = smul.addr %s793, 9
      %s795 = smul.addr %s794, 4
      %s796 = scalar_lea.vmem %s12, %s795
      %p797 = scmp.lt.s32.totalorder %s33, 1
      %s798 = scalar_select %p797, %s33, 1
      %s799 = scalar_lea.vmem %s13, %s798
      %p800 = scmp.lt.s32.totalorder %s33, 1
      %s801 = scalar_select %p800, %s33, 1
      %s802 = smul.addr %s801, 24
      %s803 = smul.addr %s802, 4
      %s804 = scalar_lea.vmem %s14, %s803
      %p805 = scmp.lt.s32.totalorder %s33, 1
      %s806 = scalar_select %p805, %s33, 1
      %s807 = smul.addr %s806, 8
      %s808 = smul.addr %s807, 4
      %s809 = scalar_lea.vmem %s15, %s808
      %p810 = scmp.lt.s32.totalorder %s33, 1
      %s811 = scalar_select %p810, %s33, 1
      %s812 = scalar_lea.vmem %s16, %s811
      %p813 = scmp.lt.s32.totalorder %s33, 1
      %s814 = scalar_select %p813, %s33, 1
      %s815 = smul.addr %s814, 4
      %s816 = smul.addr %s815, 4
      %s817 = scalar_lea.vmem %s17, %s816
      %p818 = scmp.lt.s32.totalorder %s33, 1
      %s819 = scalar_select %p818, %s33, 1
      %s820 = scalar_lea.vmem %s18, %s819
      %p822 = scmp.eq.s32.totalorder %s33, 0
      // Predicated region
      $region97: #{encoder_forward.2} parent=95 // pred_check
        %p823 = pneg %p822
      $region98: #{encoder_forward.2} parent=95 // pred_check_branch
        %825 = sbr.rel (%p823) target = $region100
      $region99: #{encoder_forward.2} parent=95 // pred_region
        %v826 = vld [vmem:[%s0] sm:$0xff]
        %vm827 = vcmask 261120
        %828 = vst.msk [vmem:[%s19] sm:$0xff] %vm827, %v826
        %vm829 = vcmask 785408
        %830 = vst.msk [vmem:[%s20] sm:$0xff] %vm829, 0.0
        %v831 = vld [vmem:[%s1] sm:$0xff]
        %vm832 = vcmask 23552
        %833 = vst.msk [vmem:[%s21] sm:$0xff] %vm832, %v831
      $region100: #{encoder_forward.2} parent=95 // pred_fallthru
        _
      %v834 = vld [vmem:[%s19] sm:$0xff]
      %v835 = vld [vmem:[%s20] sm:$0xff]
      %v836 = vld [vmem:[%s21] sm:$0xff]
      %vm837 = vcmask 261120
      %v838 = vsel %vm837, %v834, 0.0
      %839 = vadd.xlane.f32.xlu0 %v838
      %v840 = vpop.xlane.xlu0 %839
      %v841 = vrcp.pop 32.0
      %v842 = vmul.f32 32.0, %v841
      %v843 = vsub.f32 1.0, %v842
      %v844 = vmul.f32 %v841, %v843
      %v845 = vadd.f32 %v841, %v844
      %vm846 = vweird.f32 %v841
      %v847 = vsel %vm846, %v841, %v845
      %v848 = vmul.f32 %v840, %v847
      %v849 = vsub.f32 %v834, %v848
      %v850 = vmul.f32 %v849, %v849
      %v851 = vsel %vm837, %v850, 0.0
      %852 = vadd.xlane.f32.xlu0 %v851
      %v853 = vpop.xlane.xlu0 %852
      %v854 = vmul.f32 %v853, %v847
      %v855 = vadd.f32 %v854, 1e-05
      %v856 = vrsqrt.pop %v855
      %v857 = vmul.f32 %v856, %v855
      %v858 = vmul.f32 %v857, %v856
      %v859 = vmul.f32 0.5, %v858
      %v860 = vsub.f32 1.5, %v859
      %v861 = vmul.f32 %v856, %v860
      %vm862 = vweird.f32 %v855
      %vm863 = vweird.f32 %v856
      %vm864 = vmor %vm862, %vm863
      %v865 = vsel %vm864, %v856, %v861
      %v866 = vmul.f32 %v849, %v865
      %v867 = vld [vmem:[%s775] sm:$0x1]
      %v869 = vperm.slane %v867, 0
      %v871 = vmul.f32 %v866, %v869
      %v872 = vld [vmem:[%s778] sm:$0x1]
      %v874 = vperm.slane %v872, 0
      %v876 = vadd.f32 %v871, %v874
      %v877 = vmul.f32 %v835, %v835
      %879 = vrot.lane.b32.xlu0 %v877, 96
      %v880 = vpop.permute.xlu0 %879
      %v882 = vadd.f32 %v877, %v880
      %883 = vrot.lane.b32.xlu0 %v877, 64
      %v884 = vpop.permute.xlu0 %883
      %v886 = vadd.f32 %v882, %v884
      %v887 = vmax.f32 %v886, 1e-08
      %v888 = vsel %vm837, %v887, 0.0
      %889 = vadd.xlane.f32.xlu0 %v888
      %v890 = vpop.xlane.xlu0 %889
      %v891 = vmul.f32 %v890, %v847
      %v892 = vrsqrt.pop %v891
      %v893 = vmul.f32 %v892, %v891
      %v894 = vmul.f32 %v893, %v892
      %v895 = vmul.f32 0.5, %v894
      %v896 = vsub.f32 1.5, %v895
      %v897 = vmul.f32 %v892, %v896
      %vm898 = vweird.f32 %v891
      %vm899 = vweird.f32 %v892
      %vm900 = vmor %vm898, %vm899
      %v901 = vsel %vm900, %v892, %v897
      %v902 = vmul.f32 %v835, %v901
      %v903 = vld [vmem:[%s783] sm:$0xf]
      %v904 = vld [vmem:[%s783 + $0x4] sm:$0xf]
      %v905 = vld [vmem:[%s783 + $0x8] sm:$0xf]
      %v906 = vld [vmem:[%s783 + $0xc] sm:$0xf]
      %v907 = vpack.c.bf16 %v876, %v876
      %v908 = vld [vmem:[%s786] sm:$0x1]
      %v910 = vperm.slane %v908, 0
      %v916 = vunpack.c.l.b16 %v903
      %v917 = vunpack.c.l.b16 %v904
      %v918 = vunpack.c.l.b16 %v905
      %v919 = vunpack.c.l.b16 %v906
      %v920 = vpack.c.b16 %v917, %v916
      %v921 = vpack.c.b16 %v919, %v918
      %v925 = vsel %vm837, %v907, 0
      %927 = vmatpush.bf16.msra.mxu0 0
      %928 = vmatpush.bf16.msra.mxu0 0
      %929 = vmatpush.bf16.msra.mxu0 0
      %930 = vmatpush.bf16.msra.mxu0 0
      %931 = vmatpush.bf16.msra.mxu0 0
      %932 = vmatpush.bf16.msra.mxu0 0
      %933 = vmatpush.bf16.msra.mxu0 %v921
      %934 = vmatpush.bf16.msra.mxu0 %v920
      %935 = vmatmul.bf16.gmra.mxu0 %v925
      %v936 = vpop.f32.mrf.mxu0
      %v937 = vadd.f32 %v910, %v936
      %v938 = vpop.f32.mrf.mxu0
      %939 = vdwg.mxu0
      %v940 = vld [vmem:[%s791] sm:$0xf]
      %v941 = vld [vmem:[%s791 + $0x4] sm:$0xf]
      %v942 = vld [vmem:[%s791 + $0x8] sm:$0xf]
      %v943 = vld [vmem:[%s791 + $0xc] sm:$0xf]
      %v944 = vld [vmem:[%s791 + $0x10] sm:$0xf]
      %v945 = vld [vmem:[%s791 + $0x14] sm:$0xf]
      %v946 = vld [vmem:[%s791 + $0x18] sm:$0xf]
      %v947 = vld [vmem:[%s791 + $0x1c] sm:$0xf]
      %v948 = vld [vmem:[%s791 + $0x20] sm:$0xf]
      %v949 = vld [vmem:[%s791 + $0x24] sm:$0xf]
      %v950 = vld [vmem:[%s791 + $0x28] sm:$0xf]
      %v951 = vld [vmem:[%s791 + $0x2c] sm:$0xf]
      %v952 = vpack.c.bf16 %v902, %v902
      %v965 = vunpack.c.l.b16 %v940
      %v966 = vunpack.c.l.b16 %v941
      %v967 = vunpack.c.l.b16 %v942
      %v968 = vunpack.c.l.b16 %v943
      %v969 = vunpack.c.l.b16 %v944
      %v970 = vunpack.c.l.b16 %v945
      %v971 = vunpack.c.l.b16 %v946
      %v972 = vunpack.c.l.b16 %v947
      %v973 = vunpack.c.l.b16 %v948
      %v974 = vunpack.c.l.b16 %v949
      %v975 = vunpack.c.l.b16 %v950
      %v976 = vunpack.c.l.b16 %v951
      %v977 = vpack.c.b16 %v966, %v965
      %v978 = vpack.c.b16 %v968, %v967
      %v979 = vpack.c.b16 %v970, %v969
      %v980 = vpack.c.b16 %v972, %v971
      %v981 = vpack.c.b16 %v974, %v973
      %v982 = vpack.c.b16 %v976, %v975
      %vm989 = vcmask 785408
      %v991 = vsel %vm989, %v952, 0
      %993 = vmatpush.bf16.msra.mxu0 0
      %994 = vmatpush.bf16.msra.mxu0 0
      %995 = vmatpush.bf16.msra.mxu0 %v982
      %996 = vmatpush.bf16.msra.mxu0 %v981
      %997 = vmatpush.bf16.msra.mxu0 %v980
      %998 = vmatpush.bf16.msra.mxu0 %v979
      %999 = vmatpush.bf16.msra.mxu0 %v978
      %1000 = vmatpush.bf16.msra.mxu0 %v977
      %1001 = vmatmul.bf16.gmra.mxu0 %v991
      %v1002 = vpop.f32.mrf.mxu0
      %v1003 = vadd.f32 0.0, %v1002
      %v1004 = vpop.f32.mrf.mxu0
      %1005 = vdwg.mxu0
      %1007 = vrot.lane.b32.xlu0 %v937, 32
      %v1008 = vpop.permute.xlu0 %1007
      %1011 = vrot.lane.b32.xlu0 %v1003, 64
      %v1012 = vpop.permute.xlu0 %1011
      %1015 = vrot.lane.b32.xlu0 %v836, 32
      %v1016 = vpop.permute.xlu0 %1015
      %v1018 = vsel %vm837, %v876, %v1008
      %vm1019 = vcmask 523264
      %v1020 = vsel %vm1019, %v1018, %v1012
      %v1021 = vsel %vm837, %v1012, %v1016
      %v1022 = vld [vmem:[%s4] sm:$0xff]
      %v1023 = vld [vmem:[%s4 + $0x8] sm:$0xff]
      %v1024 = vld [vmem:[%s4 + $0x10] sm:$0xff]
      %vm1025 = vcmask 64512
      %v1027 = vsel %vm1025, %v1022, 0
      %v1030 = vsel %vm1025, %v1023, 0
      %v1033 = vsel %vm1025, %v1024, 0
      %1035 = vmatpush.msra.mxu0 0.0
      %1036 = vmatpush.msra.mxu0 0.0
      %1037 = vmatpush.msra.mxu0 0.0
      %1038 = vmatpush.msra.mxu0 0.0
      %1039 = vmatpush.msra.mxu0 0.0
      %1040 = vmatpush.msra.mxu0 0.0
      %1041 = vmatpush.msra.mxu0 0.0
      %1042 = vmatpush.msra.mxu0 0.0
      %1043 = vmatpush.msra.mxu0 0.0
      %1044 = vmatpush.msra.mxu0 0.0
      %1045 = vmatpush.msra.mxu0 0.0
      %1046 = vmatpush.msra.mxu0 0.0
      %1047 = vmatpush.msra.mxu0 0.0
      %1048 = vmatpush.msra.mxu0 0.0
      %1049 = vmatpush.msra.mxu0 0.0
      %1050 = vmatpush.msra.mxu0 %v1020
      %1051 = vmatmul.f32.gmra.mxu0 %v1027
      %v1052 = vpop.f32.mrf.mxu0
      %v1053 = vadd.f32 0.0, %v1052
      %1054 = vmatmul.f32.gmra.mxu0 %v1030
      %v1055 = vpop.f32.mrf.mxu0
      %v1056 = vadd.f32 0.0, %v1055
      %1057 = vmatmul.f32.gmra.mxu0 %v1033
      %v1058 = vpop.f32.mrf.mxu0
      %v1059 = vadd.f32 0.0, %v1058
      %1060 = vdwg.mxu0
      %1061 = vmatpush.msra.mxu0 0.0
      %1062 = vmatpush.msra.mxu0 0.0
      %1063 = vmatpush.msra.mxu0 0.0
      %1064 = vmatpush.msra.mxu0 0.0
      %1065 = vmatpush.msra.mxu0 0.0
      %1066 = vmatpush.msra.mxu0 0.0
      %1067 = vmatpush.msra.mxu0 0.0
      %1068 = vmatpush.msra.mxu0 0.0
      %1069 = vmatpush.msra.mxu0 0.0
      %1070 = vmatpush.msra.mxu0 0.0
      %1071 = vmatpush.msra.mxu0 0.0
      %1072 = vmatpush.msra.mxu0 0.0
      %1073 = vmatpush.msra.mxu0 0.0
      %1074 = vmatpush.msra.mxu0 0.0
      %1075 = vmatpush.msra.mxu0 0.0
      %1076 = vmatpush.msra.mxu0 %v1021
      %1077 = vmatmul.f32.gmra.mxu0 %v1027
      %v1078 = vpop.f32.mrf.mxu0
      %v1079 = vadd.f32 0.0, %v1078
      %1080 = vmatmul.f32.gmra.mxu0 %v1030
      %v1081 = vpop.f32.mrf.mxu0
      %v1082 = vadd.f32 0.0, %v1081
      %1083 = vmatmul.f32.gmra.mxu0 %v1033
      %v1084 = vpop.f32.mrf.mxu0
      %v1085 = vadd.f32 0.0, %v1084
      %1086 = vdwg.mxu0
      %v1087 = vld [vmem:[%s5] sm:$0xff]
      %v1088 = vld [vmem:[%s5 + $0x8] sm:$0xff]
      %v1089 = vld [vmem:[%s5 + $0x10] sm:$0xff]
      %v1091 = vsel %vm1025, %v1087, 0
      %v1094 = vsel %vm1025, %v1088, 0
      %v1097 = vsel %vm1025, %v1089, 0
      %1099 = vmatpush.msra.mxu0 0.0
      %1100 = vmatpush.msra.mxu0 0.0
      %1101 = vmatpush.msra.mxu0 0.0
      %1102 = vmatpush.msra.mxu0 0.0
      %1103 = vmatpush.msra.mxu0 0.0
      %1104 = vmatpush.msra.mxu0 0.0
      %1105 = vmatpush.msra.mxu0 0.0
      %1106 = vmatpush.msra.mxu0 0.0
      %1107 = vmatpush.msra.mxu0 0.0
      %1108 = vmatpush.msra.mxu0 0.0
      %1109 = vmatpush.msra.mxu0 0.0
      %1110 = vmatpush.msra.mxu0 0.0
      %1111 = vmatpush.msra.mxu0 0.0
      %1112 = vmatpush.msra.mxu0 0.0
      %1113 = vmatpush.msra.mxu0 0.0
      %1114 = vmatpush.msra.mxu0 %v1020
      %1115 = vmatmul.f32.gmra.mxu0 %v1091
      %v1116 = vpop.f32.mrf.mxu0
      %v1117 = vadd.f32 0.0, %v1116
      %1118 = vmatmul.f32.gmra.mxu0 %v1094
      %v1119 = vpop.f32.mrf.mxu0
      %v1120 = vadd.f32 0.0, %v1119
      %1121 = vmatmul.f32.gmra.mxu0 %v1097
      %v1122 = vpop.f32.mrf.mxu0
      %v1123 = vadd.f32 0.0, %v1122
      %1124 = vdwg.mxu0
      %1125 = vmatpush.msra.mxu0 0.0
      %1126 = vmatpush.msra.mxu0 0.0
      %1127 = vmatpush.msra.mxu0 0.0
      %1128 = vmatpush.msra.mxu0 0.0
      %1129 = vmatpush.msra.mxu0 0.0
      %1130 = vmatpush.msra.mxu0 0.0
      %1131 = vmatpush.msra.mxu0 0.0
      %1132 = vmatpush.msra.mxu0 0.0
      %1133 = vmatpush.msra.mxu0 0.0
      %1134 = vmatpush.msra.mxu0 0.0
      %1135 = vmatpush.msra.mxu0 0.0
      %1136 = vmatpush.msra.mxu0 0.0
      %1137 = vmatpush.msra.mxu0 0.0
      %1138 = vmatpush.msra.mxu0 0.0
      %1139 = vmatpush.msra.mxu0 0.0
      %1140 = vmatpush.msra.mxu0 %v1021
      %1141 = vmatmul.f32.gmra.mxu0 %v1091
      %v1142 = vpop.f32.mrf.mxu0
      %v1143 = vadd.f32 0.0, %v1142
      %1144 = vmatmul.f32.gmra.mxu0 %v1094
      %v1145 = vpop.f32.mrf.mxu0
      %v1146 = vadd.f32 0.0, %v1145
      %1147 = vmatmul.f32.gmra.mxu0 %v1097
      %v1148 = vpop.f32.mrf.mxu0
      %v1149 = vadd.f32 0.0, %v1148
      %1150 = vdwg.mxu0
      %v1151 = vsub.f32 %v1143, %v1079
      %v1152 = vsub.f32 %v1146, %v1082
      %v1153 = vsub.f32 %v1149, %v1085
      %v1154 = vld [vmem:[%s2] sm:$0xff]
      %v1155 = vld [vmem:[%s2 + $0x8] sm:$0xff]
      %v1156 = vld [vmem:[%s2 + $0x10] sm:$0xff]
      %1160 = vrot.lane.b32.xlu0 %v1053, 32
      %v1161 = vpop.permute.xlu0 %1160
      %1162 = vrot.lane.b32.xlu0 %v1056, 32
      %v1163 = vpop.permute.xlu0 %1162
      %1164 = vrot.lane.b32.xlu0 %v1059, 32
      %v1165 = vpop.permute.xlu0 %1164
      %1172 = vrot.lane.b32.xlu0 %v1154, 64
      %v1173 = vpop.permute.xlu0 %1172
      %1174 = vrot.lane.b32.xlu0 %v1155, 64
      %v1175 = vpop.permute.xlu0 %1174
      %1176 = vrot.lane.b32.xlu0 %v1156, 64
      %v1177 = vpop.permute.xlu0 %1176
      %v1181 = vsel %vm837, %v1117, %v1161
      %v1182 = vsel %vm837, %v1120, %v1163
      %v1183 = vsel %vm837, %v1123, %v1165
      %v1184 = vsel %vm1019, %v1181, %v1173
      %v1185 = vsel %vm1019, %v1182, %v1175
      %v1186 = vsel %vm1019, %v1183, %v1177
      %v1187 = vld [vmem:[%s796] sm:$0xf]
      %v1188 = vld [vmem:[%s796 + $0x4] sm:$0xf]
      %v1189 = vld [vmem:[%s796 + $0x8] sm:$0xf]
      %v1190 = vld [vmem:[%s796 + $0xc] sm:$0xf]
      %v1191 = vld [vmem:[%s796 + $0x10] sm:$0xf]
      %v1192 = vld [vmem:[%s796 + $0x14] sm:$0xf]
      %v1193 = vld [vmem:[%s796 + $0x18] sm:$0xf]
      %v1194 = vld [vmem:[%s796 + $0x1c] sm:$0xf]
      %v1195 = vld [vmem:[%s796 + $0x20] sm:$0xf]
      %v1196 = vpack.c.bf16 %v1185, %v1184
      %v1197 = vpack.c.bf16 %v1186, %v1186
      %v1198 = vld [vmem:[%s799] sm:$0x1]
      %v1200 = vperm.slane %v1198, 0
      %v1211 = vunpack.c.l.b16 %v1187
      %v1212 = vunpack.c.l.b16 %v1188
      %v1213 = vunpack.c.l.b16 %v1189
      %v1214 = vunpack.c.l.b16 %v1190
      %v1215 = vunpack.c.l.b16 %v1191
      %v1216 = vunpack.c.l.b16 %v1192
      %v1217 = vunpack.c.l.b16 %v1193
      %v1218 = vunpack.c.l.b16 %v1194
      %v1219 = vunpack.c.l.b16 %v1195
      %v1220 = vpack.c.b16 %v1212, %v1211
      %v1221 = vpack.c.b16 %v1214, %v1213
      %v1222 = vpack.c.b16 %v1216, %v1215
      %v1223 = vpack.c.b16 %v1218, %v1217
      %v1224 = vpack.c.b16 %v1219, %v1219
      %vm1229 = vcmask 588800
      %v1231 = vsel %vm1229, %v1196, 0
      %v1234 = vsel %vm1229, %v1197, 0
      %vm1236 = vcmask 1043456
      %v1238 = vsel %vm1236, %v1224, 0
      %1240 = vmatpush.bf16.msra.mxu0 0
      %1241 = vmatpush.bf16.msra.mxu0 0
      %1242 = vmatpush.bf16.msra.mxu0 0
      %1243 = vmatpush.bf16.msra.mxu0 %v1238
      %1244 = vmatpush.bf16.msra.mxu0 %v1223
      %1245 = vmatpush.bf16.msra.mxu0 %v1222
      %1246 = vmatpush.bf16.msra.mxu0 %v1221
      %1247 = vmatpush.bf16.msra.mxu0 %v1220
      %1248 = vmatmul.bf16.gmra.mxu0 %v1231
      %v1249 = vpop.f32.mrf.mxu0
      %v1250 = vadd.f32 %v1200, %v1249
      %v1251 = vpop.f32.mrf.mxu0
      %v1252 = vadd.f32 %v1200, %v1251
      %1253 = vmatmul.bf16.gmra.mxu0 %v1234
      %v1254 = vpop.f32.mrf.mxu0
      %v1255 = vadd.f32 %v1200, %v1254
      %v1256 = vpop.f32.mrf.mxu0
      %1257 = vdwg.mxu0
      %v1258 = vld [vmem:[%s3] sm:$0xff]
      %v1259 = vld [vmem:[%s3 + $0x8] sm:$0xff]
      %v1260 = vld [vmem:[%s3 + $0x10] sm:$0xff]
      %1264 = vrot.lane.b32.xlu0 %v1079, 96
      %v1265 = vpop.permute.xlu0 %1264
      %1266 = vrot.lane.b32.xlu0 %v1082, 96
      %v1267 = vpop.permute.xlu0 %1266
      %1268 = vrot.lane.b32.xlu0 %v1085, 96
      %v1269 = vpop.permute.xlu0 %1268
      %v1273 = vmul.f32 %v1117, %v1265
      %v1274 = vmul.f32 %v1120, %v1267
      %v1275 = vmul.f32 %v1123, %v1269
      %v1276 = vmul.f32 %v1143, %v1161
      %v1277 = vmul.f32 %v1146, %v1163
      %v1278 = vmul.f32 %v1149, %v1165
      %1282 = vrot.lane.b32.xlu0 %v1276, 96
      %v1283 = vpop.permute.xlu0 %1282
      %1284 = vrot.lane.b32.xlu0 %v1277, 96
      %v1285 = vpop.permute.xlu0 %1284
      %1286 = vrot.lane.b32.xlu0 %v1278, 96
      %v1287 = vpop.permute.xlu0 %1286
      %v1291 = vsub.f32 %v1273, %v1283
      %v1292 = vsub.f32 %v1274, %v1285
      %v1293 = vsub.f32 %v1275, %v1287
      %1294 = vrot.lane.b32.xlu0 %v1053, 64
      %v1295 = vpop.permute.xlu0 %1294
      %1296 = vrot.lane.b32.xlu0 %v1056, 64
      %v1297 = vpop.permute.xlu0 %1296
      %1298 = vrot.lane.b32.xlu0 %v1059, 64
      %v1299 = vpop.permute.xlu0 %1298
      %v1303 = vmul.f32 %v1143, %v1295
      %v1304 = vmul.f32 %v1146, %v1297
      %v1305 = vmul.f32 %v1149, %v1299
      %1306 = vrot.lane.b32.xlu0 %v1079, 64
      %v1307 = vpop.permute.xlu0 %1306
      %1308 = vrot.lane.b32.xlu0 %v1082, 64
      %v1309 = vpop.permute.xlu0 %1308
      %1310 = vrot.lane.b32.xlu0 %v1085, 64
      %v1311 = vpop.permute.xlu0 %1310
      %v1315 = vmul.f32 %v1117, %v1307
      %v1316 = vmul.f32 %v1120, %v1309
      %v1317 = vmul.f32 %v1123, %v1311
      %1321 = vrot.lane.b32.xlu0 %v1315, 64
      %v1322 = vpop.permute.xlu0 %1321
      %1323 = vrot.lane.b32.xlu0 %v1316, 64
      %v1324 = vpop.permute.xlu0 %1323
      %1325 = vrot.lane.b32.xlu0 %v1317, 64
      %v1326 = vpop.permute.xlu0 %1325
      %v1330 = vsub.f32 %v1303, %v1322
      %v1331 = vsub.f32 %v1304, %v1324
      %v1332 = vsub.f32 %v1305, %v1326
      %1333 = vrot.lane.b32.xlu0 %v1053, 96
      %v1334 = vpop.permute.xlu0 %1333
      %1335 = vrot.lane.b32.xlu0 %v1056, 96
      %v1336 = vpop.permute.xlu0 %1335
      %1337 = vrot.lane.b32.xlu0 %v1059, 96
      %v1338 = vpop.permute.xlu0 %1337
      %v1342 = vmul.f32 %v1117, %v1334
      %v1343 = vmul.f32 %v1120, %v1336
      %v1344 = vmul.f32 %v1123, %v1338
      %v1345 = vmul.f32 %v1117, %v1161
      %v1346 = vmul.f32 %v1120, %v1163
      %v1347 = vmul.f32 %v1123, %v1165
      %1351 = vrot.lane.b32.xlu0 %v1345, 96
      %v1352 = vpop.permute.xlu0 %1351
      %1353 = vrot.lane.b32.xlu0 %v1346, 96
      %v1354 = vpop.permute.xlu0 %1353
      %1355 = vrot.lane.b32.xlu0 %v1347, 96
      %v1356 = vpop.permute.xlu0 %1355
      %v1360 = vsub.f32 %v1342, %v1352
      %v1361 = vsub.f32 %v1343, %v1354
      %v1362 = vsub.f32 %v1344, %v1356
      %v1363 = vmul.f32 %v1250, %v1334
      %v1364 = vmul.f32 %v1252, %v1336
      %v1365 = vmul.f32 %v1255, %v1338
      %1369 = vrot.lane.b32.xlu0 %v1291, 64
      %v1370 = vpop.permute.xlu0 %1369
      %1371 = vrot.lane.b32.xlu0 %v1292, 64
      %v1372 = vpop.permute.xlu0 %1371
      %1373 = vrot.lane.b32.xlu0 %v1293, 64
      %v1374 = vpop.permute.xlu0 %1373
      %v1378 = vmul.f32 %v1250, %v1370
      %v1379 = vmul.f32 %v1252, %v1372
      %v1380 = vmul.f32 %v1255, %v1374
      %1382 = vset.pattern.permute.xlu0 0
      %1383 = vperm.xlu0 %1382, %v1258
      %v1384 = vpop.permute.xlu0 %1383
      %1387 = vset.pattern.permute.xlu0 0
      %1388 = vperm.xlu0 %1387, %v1259
      %v1389 = vpop.permute.xlu0 %1388
      %1392 = vset.pattern.permute.xlu0 0
      %1393 = vperm.xlu0 %1392, %v1260
      %v1394 = vpop.permute.xlu0 %1393
      %v1396 = vmul.f32 %v1250, %v1384
      %v1397 = vmul.f32 %v1252, %v1389
      %v1398 = vmul.f32 %v1255, %v1394
      %1402 = vrot.lane.b32.xlu0 %v1396, 96
      %v1403 = vpop.permute.xlu0 %1402
      %1404 = vrot.lane.b32.xlu0 %v1397, 96
      %v1405 = vpop.permute.xlu0 %1404
      %1406 = vrot.lane.b32.xlu0 %v1398, 96
      %v1407 = vpop.permute.xlu0 %1406
      %v1411 = vadd.f32 %v1378, %v1403
      %v1412 = vadd.f32 %v1379, %v1405
      %v1413 = vadd.f32 %v1380, %v1407
      %1417 = vrot.lane.b32.xlu0 %v1330, 32
      %v1418 = vpop.permute.xlu0 %1417
      %1419 = vrot.lane.b32.xlu0 %v1331, 32
      %v1420 = vpop.permute.xlu0 %1419
      %1421 = vrot.lane.b32.xlu0 %v1332, 32
      %v1422 = vpop.permute.xlu0 %1421
      %v1426 = vmul.f32 %v1250, %v1418
      %v1427 = vmul.f32 %v1252, %v1420
      %v1428 = vmul.f32 %v1255, %v1422
      %1429 = vset.pattern.permute.xlu0 1
      %1430 = vperm.xlu0 %1429, %v1258
      %v1431 = vpop.permute.xlu0 %1430
      %1433 = vset.pattern.permute.xlu0 1
      %1434 = vperm.xlu0 %1433, %v1259
      %v1435 = vpop.permute.xlu0 %1434
      %1437 = vset.pattern.permute.xlu0 1
      %1438 = vperm.xlu0 %1437, %v1260
      %v1439 = vpop.permute.xlu0 %1438
      %v1441 = vmul.f32 %v1250, %v1431
      %v1442 = vmul.f32 %v1252, %v1435
      %v1443 = vmul.f32 %v1255, %v1439
      %1447 = vrot.lane.b32.xlu0 %v1441, 96
      %v1448 = vpop.permute.xlu0 %1447
      %1449 = vrot.lane.b32.xlu0 %v1442, 96
      %v1450 = vpop.permute.xlu0 %1449
      %1451 = vrot.lane.b32.xlu0 %v1443, 96
      %v1452 = vpop.permute.xlu0 %1451
      %v1456 = vadd.f32 %v1426, %v1448
      %v1457 = vadd.f32 %v1427, %v1450
      %v1458 = vadd.f32 %v1428, %v1452
      %1462 = vrot.lane.b32.xlu0 %v1360, 96
      %v1463 = vpop.permute.xlu0 %1462
      %1464 = vrot.lane.b32.xlu0 %v1361, 96
      %v1465 = vpop.permute.xlu0 %1464
      %1466 = vrot.lane.b32.xlu0 %v1362, 96
      %v1467 = vpop.permute.xlu0 %1466
      %v1471 = vmul.f32 %v1250, %v1463
      %v1472 = vmul.f32 %v1252, %v1465
      %v1473 = vmul.f32 %v1255, %v1467
      %1474 = vset.pattern.permute.xlu0 2
      %1475 = vperm.xlu0 %1474, %v1258
      %v1476 = vpop.permute.xlu0 %1475
      %1478 = vset.pattern.permute.xlu0 2
      %1479 = vperm.xlu0 %1478, %v1259
      %v1480 = vpop.permute.xlu0 %1479
      %1482 = vset.pattern.permute.xlu0 2
      %1483 = vperm.xlu0 %1482, %v1260
      %v1484 = vpop.permute.xlu0 %1483
      %v1486 = vmul.f32 %v1250, %v1476
      %v1487 = vmul.f32 %v1252, %v1480
      %v1488 = vmul.f32 %v1255, %v1484
      %1492 = vrot.lane.b32.xlu0 %v1486, 96
      %v1493 = vpop.permute.xlu0 %1492
      %1494 = vrot.lane.b32.xlu0 %v1487, 96
      %v1495 = vpop.permute.xlu0 %1494
      %1496 = vrot.lane.b32.xlu0 %v1488, 96
      %v1497 = vpop.permute.xlu0 %1496
      %v1501 = vadd.f32 %v1471, %v1493
      %v1502 = vadd.f32 %v1472, %v1495
      %v1503 = vadd.f32 %v1473, %v1497
      %1505 = vset.pattern.permute.xlu0 96
      %1506 = vperm.xlu0 %1505, %v1250
      %v1507 = vpop.permute.xlu0 %1506
      %1510 = vset.pattern.permute.xlu0 96
      %1511 = vperm.xlu0 %1510, %v1252
      %v1512 = vpop.permute.xlu0 %1511
      %1515 = vset.pattern.permute.xlu0 96
      %1516 = vperm.xlu0 %1515, %v1255
      %v1517 = vpop.permute.xlu0 %1516
      %v1519 = vmul.f32 %v1507, %v1151
      %v1520 = vmul.f32 %v1512, %v1152
      %v1521 = vmul.f32 %v1517, %v1153
      %1525 = vrot.lane.b32.xlu0 %v1456, 32
      %v1526 = vpop.permute.xlu0 %1525
      %1527 = vrot.lane.b32.xlu0 %v1457, 32
      %v1528 = vpop.permute.xlu0 %1527
      %1529 = vrot.lane.b32.xlu0 %v1458, 32
      %v1530 = vpop.permute.xlu0 %1529
      %1537 = vrot.lane.b32.xlu0 %v1501, 64
      %v1538 = vpop.permute.xlu0 %1537
      %1539 = vrot.lane.b32.xlu0 %v1502, 64
      %v1540 = vpop.permute.xlu0 %1539
      %1541 = vrot.lane.b32.xlu0 %v1503, 64
      %v1542 = vpop.permute.xlu0 %1541
      %1549 = vrot.lane.b32.xlu0 %v1519, 96
      %v1550 = vpop.permute.xlu0 %1549
      %1551 = vrot.lane.b32.xlu0 %v1520, 96
      %v1552 = vpop.permute.xlu0 %1551
      %1553 = vrot.lane.b32.xlu0 %v1521, 96
      %v1554 = vpop.permute.xlu0 %1553
      %v1558 = vsel %vm837, %v1363, %v1411
      %v1559 = vsel %vm837, %v1364, %v1412
      %v1560 = vsel %vm837, %v1365, %v1413
      %v1561 = vsel %vm1019, %v1558, %v1526
      %v1562 = vsel %vm1019, %v1559, %v1528
      %v1563 = vsel %vm1019, %v1560, %v1530
      %v1564 = vsel %vm989, %v1561, %v1538
      %v1565 = vsel %vm989, %v1562, %v1540
      %v1566 = vsel %vm989, %v1563, %v1542
      %v1567 = vld [vmem:[%s6] sm:$0xff]
      %vm1568 = vcmask 195584
      %v1570 = vsel %vm1568, %v1567, 0
      %1572 = vmatpush.msra.mxu0 0.0
      %1573 = vmatpush.msra.mxu0 0.0
      %1574 = vmatpush.msra.mxu0 0.0
      %1575 = vmatpush.msra.mxu0 0.0
      %1576 = vmatpush.msra.mxu0 0.0
      %1577 = vmatpush.msra.mxu0 0.0
      %1578 = vmatpush.msra.mxu0 0.0
      %1579 = vmatpush.msra.mxu0 0.0
      %1580 = vmatpush.msra.mxu0 0.0
      %1581 = vmatpush.msra.mxu0 0.0
      %1582 = vmatpush.msra.mxu0 0.0
      %1583 = vmatpush.msra.mxu0 0.0
      %1584 = vmatpush.msra.mxu0 0.0
      %1585 = vmatpush.msra.mxu0 %v1566
      %1586 = vmatpush.msra.mxu0 %v1565
      %1587 = vmatpush.msra.mxu0 %v1564
      %1588 = vmatmul.f32.gmra.mxu0 %v1570
      %v1589 = vpop.f32.mrf.mxu0
      %v1590 = vadd.f32 0.0, %v1589
      %1591 = vdwg.mxu0
      %1592 = vmatpush.msra.mxu0 0.0
      %1593 = vmatpush.msra.mxu0 0.0
      %1594 = vmatpush.msra.mxu0 0.0
      %1595 = vmatpush.msra.mxu0 0.0
      %1596 = vmatpush.msra.mxu0 0.0
      %1597 = vmatpush.msra.mxu0 0.0
      %1598 = vmatpush.msra.mxu0 0.0
      %1599 = vmatpush.msra.mxu0 0.0
      %1600 = vmatpush.msra.mxu0 0.0
      %1601 = vmatpush.msra.mxu0 0.0
      %1602 = vmatpush.msra.mxu0 0.0
      %1603 = vmatpush.msra.mxu0 0.0
      %1604 = vmatpush.msra.mxu0 0.0
      %1605 = vmatpush.msra.mxu0 %v1554
      %1606 = vmatpush.msra.mxu0 %v1552
      %1607 = vmatpush.msra.mxu0 %v1550
      %1608 = vmatmul.f32.gmra.mxu0 %v1570
      %v1609 = vpop.f32.mrf.mxu0
      %v1610 = vadd.f32 0.0, %v1609
      %1611 = vdwg.mxu0
      %v1612 = vadd.f32 %v1590, %v876
      %1614 = vrot.lane.b32.xlu0 %v902, 32
      %v1615 = vpop.permute.xlu0 %1614
      %v1617 = vadd.f32 %v1590, %v1615
      %v1618 = vadd.f32 %v1610, %v836
      %vm1619 = vcmask 23552
      %1620 = vst.msk [vmem:[%s21] sm:$0xff] %vm1619, %v1618
      %v1621 = vld [vmem:[%s804] sm:$0xff]
      %v1622 = vld [vmem:[%s804 + $0x8] sm:$0xff]
      %v1623 = vld [vmem:[%s804 + $0x10] sm:$0xff]
      %v1624 = vld [vmem:[%s804 + $0x18] sm:$0xff]
      %v1625 = vld [vmem:[%s804 + $0x20] sm:$0xff]
      %v1626 = vld [vmem:[%s804 + $0x28] sm:$0xff]
      %v1627 = vld [vmem:[%s804 + $0x30] sm:$0xff]
      %v1628 = vld [vmem:[%s804 + $0x38] sm:$0xff]
      %v1629 = vld [vmem:[%s804 + $0x40] sm:$0xff]
      %v1630 = vld [vmem:[%s804 + $0x48] sm:$0xff]
      %v1631 = vld [vmem:[%s804 + $0x50] sm:$0xff]
      %v1632 = vld [vmem:[%s804 + $0x58] sm:$0xff]
      %v1633 = vpack.c.bf16 %v1617, %v1617
      %1635 = vrot.lane.b32.xlu0 %v1633, 96
      %v1636 = vpop.permute.xlu0 %1635
      %v1649 = vunpack.c.l.b16 %v1621
      %v1650 = vunpack.c.h.b16 %v1621
      %v1651 = vunpack.c.l.b16 %v1622
      %v1652 = vunpack.c.h.b16 %v1622
      %v1653 = vunpack.c.l.b16 %v1623
      %v1654 = vunpack.c.h.b16 %v1623
      %v1655 = vunpack.c.l.b16 %v1624
      %v1656 = vunpack.c.h.b16 %v1624
      %v1657 = vunpack.c.l.b16 %v1625
      %v1658 = vunpack.c.h.b16 %v1625
      %v1659 = vunpack.c.l.b16 %v1626
      %v1660 = vunpack.c.h.b16 %v1626
      %v1661 = vunpack.c.l.b16 %v1627
      %v1662 = vunpack.c.h.b16 %v1627
      %v1663 = vunpack.c.l.b16 %v1628
      %v1664 = vunpack.c.h.b16 %v1628
      %v1665 = vunpack.c.l.b16 %v1629
      %v1666 = vunpack.c.h.b16 %v1629
      %v1667 = vunpack.c.l.b16 %v1630
      %v1668 = vunpack.c.h.b16 %v1630
      %v1669 = vunpack.c.l.b16 %v1631
      %v1670 = vunpack.c.h.b16 %v1631
      %v1671 = vunpack.c.l.b16 %v1632
      %v1672 = vunpack.c.h.b16 %v1632
      %v1673 = vpack.c.b16 %v1651, %v1649
      %v1674 = vpack.c.b16 %v1652, %v1650
      %v1675 = vpack.c.b16 %v1655, %v1653
      %v1676 = vpack.c.b16 %v1656, %v1654
      %v1677 = vpack.c.b16 %v1659, %v1657
      %v1678 = vpack.c.b16 %v1660, %v1658
      %v1679 = vpack.c.b16 %v1663, %v1661
      %v1680 = vpack.c.b16 %v1664, %v1662
      %v1681 = vpack.c.b16 %v1667, %v1665
      %v1682 = vpack.c.b16 %v1668, %v1666
      %v1683 = vpack.c.b16 %v1671, %v1669
      %v1684 = vpack.c.b16 %v1672, %v1670
      %v1698 = vsel %vm989, %v1636, 0
      %1700 = vmatpush.bf16.msra.mxu0 0
      %1701 = vmatpush.bf16.msra.mxu0 0
      %1702 = vmatpush.bf16.msra.mxu0 %v1683
      %1703 = vmatpush.bf16.msra.mxu0 %v1681
      %1704 = vmatpush.bf16.msra.mxu0 %v1679
      %1705 = vmatpush.bf16.msra.mxu0 %v1677
      %1706 = vmatpush.bf16.msra.mxu0 %v1675
      %1707 = vmatpush.bf16.msra.mxu0 %v1673
      %1708 = vmatmul.bf16.gmra.mxu0 %v1698
      %v1709 = vpop.f32.mrf.mxu0
      %v1710 = vadd.f32 0.0, %v1709
      %v1711 = vpop.f32.mrf.mxu0
      %1712 = vdwg.mxu0
      %1713 = vmatpush.bf16.msra.mxu0 0
      %1714 = vmatpush.bf16.msra.mxu0 0
      %1715 = vmatpush.bf16.msra.mxu0 %v1684
      %1716 = vmatpush.bf16.msra.mxu0 %v1682
      %1717 = vmatpush.bf16.msra.mxu0 %v1680
      %1718 = vmatpush.bf16.msra.mxu0 %v1678
      %1719 = vmatpush.bf16.msra.mxu0 %v1676
      %1720 = vmatpush.bf16.msra.mxu0 %v1674
      %1721 = vmatmul.bf16.gmra.mxu0 %v1698
      %v1722 = vpop.f32.mrf.mxu0
      %v1723 = vadd.f32 0.0, %v1722
      %v1724 = vpop.f32.mrf.mxu0
      %1725 = vdwg.mxu0
      %v1726 = vmul.f32 %v1710, %v1710
      %1728 = vrot.lane.b32.xlu0 %v1726, 96
      %v1729 = vpop.permute.xlu0 %1728
      %v1731 = vadd.f32 %v1726, %v1729
      %1732 = vrot.lane.b32.xlu0 %v1726, 64
      %v1733 = vpop.permute.xlu0 %1732
      %v1735 = vadd.f32 %v1731, %v1733
      %v1736 = vmax.f32 %v1735, 1e-06
      %v1737 = vrsqrt.pop %v1736
      %v1738 = vmul.f32 %v1737, %v1736
      %v1739 = vmul.f32 %v1738, %v1737
      %v1740 = vmul.f32 0.5, %v1739
      %v1741 = vsub.f32 1.5, %v1740
      %v1742 = vmul.f32 %v1737, %v1741
      %v1743 = vmul.f32 %v1736, %v1742
      %vm1744 = vcmp.eq.f32.partialorder %v1736, inf
      %v1745 = vsel %vm1744, %v1736, %v1743
      %vm1746 = vcmp.eq.f32.partialorder %v1736, 0.0
      %v1747 = vand.u32 %v1736, 2147483648
      %v1748 = vsel %vm1746, %v1747, %v1745
      %1750 = vrot.lane.b32.xlu0 %v1748, 32
      %v1751 = vpop.permute.xlu0 %1750
      %v1753 = vsel %vm837, %v1612, %v1751
      %v1754 = vld [vmem:[%s809] sm:$0xf]
      %v1755 = vld [vmem:[%s809 + $0x4] sm:$0xf]
      %v1756 = vld [vmem:[%s809 + $0x8] sm:$0xf]
      %v1757 = vld [vmem:[%s809 + $0xc] sm:$0xf]
      %v1758 = vld [vmem:[%s809 + $0x10] sm:$0xf]
      %v1759 = vld [vmem:[%s809 + $0x14] sm:$0xf]
      %v1760 = vld [vmem:[%s809 + $0x18] sm:$0xf]
      %v1761 = vld [vmem:[%s809 + $0x1c] sm:$0xf]
      %v1762 = vpack.c.bf16 %v1753, %v1753
      %v1763 = vld [vmem:[%s812] sm:$0x1]
      %v1765 = vperm.slane %v1763, 0
      %v1775 = vunpack.c.l.b16 %v1754
      %v1776 = vunpack.c.l.b16 %v1755
      %v1777 = vunpack.c.l.b16 %v1756
      %v1778 = vunpack.c.l.b16 %v1757
      %v1779 = vunpack.c.l.b16 %v1758
      %v1780 = vunpack.c.l.b16 %v1759
      %v1781 = vunpack.c.l.b16 %v1760
      %v1782 = vunpack.c.l.b16 %v1761
      %v1783 = vpack.c.b16 %v1776, %v1775
      %v1784 = vpack.c.b16 %v1778, %v1777
      %v1785 = vpack.c.b16 %v1780, %v1779
      %v1786 = vpack.c.b16 %v1782, %v1781
      %v1792 = vsel %vm1019, %v1762, 0
      %1794 = vmatpush.bf16.msra.mxu0 0
      %1795 = vmatpush.bf16.msra.mxu0 0
      %1796 = vmatpush.bf16.msra.mxu0 0
      %1797 = vmatpush.bf16.msra.mxu0 0
      %1798 = vmatpush.bf16.msra.mxu0 %v1786
      %1799 = vmatpush.bf16.msra.mxu0 %v1785
      %1800 = vmatpush.bf16.msra.mxu0 %v1784
      %1801 = vmatpush.bf16.msra.mxu0 %v1783
      %1802 = vmatmul.bf16.gmra.mxu0 %v1792
      %v1803 = vpop.f32.mrf.mxu0
      %v1804 = vadd.f32 %v1765, %v1803
      %v1805 = vpop.f32.mrf.mxu0
      %1806 = vdwg.mxu0
      %v1807 = vxor.u32 %v1804, 2147483648
      %v1808 = vmul.f32 %v1807, 1.442695
      %v1809 = vpow.pop %v1808
      %v1810 = vadd.f32 %v1809, 1.0
      %v1811 = vrcp.pop %v1810
      %v1812 = vmul.f32 %v1810, %v1811
      %v1813 = vsub.f32 1.0, %v1812
      %v1814 = vmul.f32 %v1811, %v1813
      %v1815 = vadd.f32 %v1811, %v1814
      %vm1816 = vweird.f32 %v1810
      %vm1817 = vweird.f32 %v1811
      %vm1818 = vmor %vm1816, %vm1817
      %v1819 = vsel %vm1818, %v1811, %v1815
      %v1820 = vand.u32 2147483647, %v1810
      %vm1821 = vcmp.eq.f32.partialorder %v1820, 8.507059e+37
      %v1822 = vand.u32 %v1810, 2147483648
      %v1823 = vor.u32 1.1754944e-38, %v1822
      %v1824 = vsel %vm1821, %v1823, %v1819
      %v1825 = vmul.f32 1.0, %v1824
      %v1826 = vmul.f32 %v1804, %v1825
      %v1827 = vld [vmem:[%s817] sm:$0xf]
      %v1828 = vld [vmem:[%s817 + $0x4] sm:$0xf]
      %v1829 = vld [vmem:[%s817 + $0x8] sm:$0xf]
      %v1830 = vld [vmem:[%s817 + $0xc] sm:$0xf]
      %v1831 = vpack.c.bf16 %v1826, %v1826
      %v1832 = vld [vmem:[%s820] sm:$0x1]
      %v1834 = vperm.slane %v1832, 0
      %v1840 = vunpack.c.l.b16 %v1827
      %v1841 = vunpack.c.l.b16 %v1828
      %v1842 = vunpack.c.l.b16 %v1829
      %v1843 = vunpack.c.l.b16 %v1830
      %v1844 = vpack.c.b16 %v1841, %v1840
      %v1845 = vpack.c.b16 %v1843, %v1842
      %v1849 = vsel %vm837, %v1831, 0
      %1851 = vmatpush.bf16.msra.mxu0 0
      %1852 = vmatpush.bf16.msra.mxu0 0
      %1853 = vmatpush.bf16.msra.mxu0 0
      %1854 = vmatpush.bf16.msra.mxu0 0
      %1855 = vmatpush.bf16.msra.mxu0 0
      %1856 = vmatpush.bf16.msra.mxu0 0
      %1857 = vmatpush.bf16.msra.mxu0 %v1845
      %1858 = vmatpush.bf16.msra.mxu0 %v1844
      %1859 = vmatmul.bf16.gmra.mxu0 %v1849
      %v1860 = vpop.f32.mrf.mxu0
      %v1861 = vadd.f32 %v1834, %v1860
      %v1862 = vpop.f32.mrf.mxu0
      %1863 = vdwg.mxu0
      %1865 = vrot.lane.b32.xlu0 %v1612, 32
      %v1866 = vpop.permute.xlu0 %1865
      %v1868 = vadd.f32 %v1861, %v1866
      %1870 = vrot.lane.b32.xlu0 %v1868, 96
      %v1871 = vpop.permute.xlu0 %1870
      %1873 = vst.msk [vmem:[%s19] sm:$0xff] %vm837, %v1871
      %1875 = vrot.lane.b32.xlu0 %v1861, 32
      %v1876 = vpop.permute.xlu0 %1875
      %1878 = vrot.lane.b32.xlu0 %v1861, 64
      %v1879 = vpop.permute.xlu0 %1878
      %v1881 = vsel %vm837, %v1861, %v1876
      %v1882 = vsel %vm1019, %v1881, %v1879
      %1885 = vrot.lane.b32.xlu0 %v1710, 32
      %v1886 = vpop.permute.xlu0 %1885
      %1887 = vrot.lane.b32.xlu0 %v1723, 32
      %v1888 = vpop.permute.xlu0 %1887
      %v1889 = vsel %vm837, %v1886, %v1888
      %v1891 = vmul.f32 %v1882, %v1889
      %1893 = vrot.lane.b32.xlu0 %v1617, 96
      %v1894 = vpop.permute.xlu0 %1893
      %v1896 = vadd.f32 %v1891, %v1894
      %1897 = vst.msk [vmem:[%s20] sm:$0xff] %vm989, %v1896
      // Predicated region
      $region101: #{encoder_forward.2} parent=95 // pred_check
        %p1898 = pneg %p505
      $region102: #{encoder_forward.2} parent=95 // pred_check_branch
        %1900 = sbr.rel (%p1898) target = $region104
      $region103: #{encoder_forward.2} parent=95 // pred_region
        _
      $region104: #{encoder_forward.2} parent=95 // pred_fallthru
        _
      // Predicated region
      $region105: #{encoder_forward.2} parent=95 // pred_check
        %p1901 = pneg %p526
      $region106: #{encoder_forward.2} parent=95 // pred_check_branch
        %1903 = sbr.rel (%p1901) target = $region108
      $region107: #{encoder_forward.2} parent=95 // pred_region
        _
      $region108: #{encoder_forward.2} parent=95 // pred_fallthru
        _
      // Predicated region
      $region109: #{encoder_forward.2} parent=95 // pred_check
        %p1904 = pneg %p547
      $region110: #{encoder_forward.2} parent=95 // pred_check_branch
        %1906 = sbr.rel (%p1904) target = $region112
      $region111: #{encoder_forward.2} parent=95 // pred_region
        _
      $region112: #{encoder_forward.2} parent=95 // pred_fallthru
        _
      // Predicated region
      $region113: #{encoder_forward.2} parent=95 // pred_check
        %p1907 = pneg %p505
      $region114: #{encoder_forward.2} parent=95 // pred_check_branch
        %1909 = sbr.rel (%p1907) target = $region116
      $region115: #{encoder_forward.2} parent=95 // pred_region
        _
      $region116: #{encoder_forward.2} parent=95 // pred_fallthru
        _
      // Predicated region
      $region117: #{encoder_forward.2} parent=95 // pred_check
        %p1910 = pneg %p526
      $region118: #{encoder_forward.2} parent=95 // pred_check_branch
        %1912 = sbr.rel (%p1910) target = $region120
      $region119: #{encoder_forward.2} parent=95 // pred_region
        _
      $region120: #{encoder_forward.2} parent=95 // pred_fallthru
        _
      // Predicated region
      $region121: #{encoder_forward.2} parent=95 // pred_check
        %p1913 = pneg %p547
      $region122: #{encoder_forward.2} parent=95 // pred_check_branch
        %1915 = sbr.rel (%p1913) target = $region124
      $region123: #{encoder_forward.2} parent=95 // pred_region
        _
      $region124: #{encoder_forward.2} parent=95 // pred_fallthru
        _
    $region96: #{encoder_forward.2} parent=5 // pred_fallthru
      _
    %p1916 = scmp.le.s32.totalorder 2, %s28
    // Predicated region
    $region125: #{encoder_forward.2} parent=5 // pred_check
      %p1917 = pneg %p1916
    $region126: #{encoder_forward.2} parent=5 // pred_check_branch
      %1919 = sbr.rel (%p1917) target = $region128
    $region127: #{encoder_forward.2} parent=5 // pred_region
      %s1920 = ssub.s32 %s28, 2
    $region128: #{encoder_forward.2} parent=5 // pred_fallthru
      _
  $region6: #{encoder_forward.2} parent=0 // loop_footer
    %s32 = sadd.s32 1, %s28
  $region7: #{encoder_forward.2} parent=0 // loop_footer_branch
    %27 = sbr.rel target = $region3
  $region8: #{encoder_forward.2} parent=0 // loop_exit
    _

</llo_original>
